<compile_context>
chip_gen: v7x
topology: tpu7x:2x2x1
jax: 0.10.0
libtpu: 0.0.40
codegen_flags: <defaults>
</compile_context>

<pallas_src>
import jax
import jax.numpy as jnp
from jax.experimental import pallas as pl
from jax.experimental.pallas import tpu as pltpu

OBS_FEATURES = 2       # CartPole-v1 without velocity terms
NUM_ACTIONS = 2
ENC = 64               # recurrent_layer_in_features
HID = 128              # hiddeen_features
NUM_LAYERS = 1


def ppo_net_kernel(x_ref, hid_ref,
                   w_enc_ref, b_enc_ref,
                   w_ih_ref, w_hh_ref, b_gates_ref,
                   w_head_ref, b_head_ref,
                   logits_ref, value_ref, next_hid_ref):
    B, T, F = x_ref.shape
    H = HID

    # ---- encoding layer: Linear(obs_features -> 64) + ReLU ----------------
    x2 = x_ref[...].reshape(B * T, F)
    enc2 = jnp.maximum(
        jnp.dot(x2, w_enc_ref[...], preferred_element_type=jnp.float32)
        + b_enc_ref[...],
        0.0)                                           # (B*T, ENC)

    # ---- hoisted input-side gate matmul (no recurrent dependence) ---------
    # gates_x = enc @ W_ih^T + (b_ih + b_hh), computed once for all steps.
    gates_x = (jnp.dot(enc2, w_ih_ref[...], preferred_element_type=jnp.float32)
               + b_gates_ref[...]).reshape(B, T, 4 * H)

    # ---- unwrap LSTM hidden state (h | c along last dim) -------------------
    hid = hid_ref[...]               # (1, B, 2H)
    h = hid[0, :, :H]                # (B, H)
    c = hid[0, :, H:]                # (B, H)

    w_hh = w_hh_ref[...]             # (H, 4H), already transposed in wrapper

    # ---- LSTM recurrence (PyTorch gate order: i, f, g, o) ------------------
    hs = []
    for t in range(T):
        gates = gates_x[:, t, :] + jnp.dot(
            h, w_hh, preferred_element_type=jnp.float32)     # (B, 4H)
        if_g = jax.nn.sigmoid(gates[:, 0:2 * H])             # [i | f] together
        i_g = if_g[:, 0:H]
        f_g = if_g[:, H:2 * H]
        g_g = jnp.tanh(gates[:, 2 * H:3 * H])
        o_g = jax.nn.sigmoid(gates[:, 3 * H:4 * H])
        c = f_g * c + i_g * g_g
        h = o_g * jnp.tanh(c)
        hs.append(h)
    # TODO(synk): for T >> 16, switch to lax.fori_loop carrying (h, c) with a
    # (T*B, H) VMEM scratch to bound vreg live ranges / compile time.

    # ---- fused actor+critic head: one (B*T,H)@(H,A+1) matmul ---------------
    lstm_out = jnp.stack(hs, axis=1).reshape(B * T, H)        # one bulk layout
    head = (jnp.dot(lstm_out, w_head_ref[...], preferred_element_type=jnp.float32)
            + b_head_ref[...])                                # (B*T, A+1)
    logits_ref[...] = head[:, :NUM_ACTIONS].reshape(B, T, NUM_ACTIONS)
    value_ref[...] = head[:, NUM_ACTIONS:].reshape(B, T, 1)

    # ---- wrap next hidden state --------------------------------------------
    next_hid_ref[...] = jnp.concatenate([h, c], axis=-1)[None, :, :]


def prepare_params(params):
    """One-time, JAX-level layout plumbing: transpose & fuse weights so the
    kernel does zero in-kernel transposes and a single fused head matmul."""
    return {
        "w_enc_t": params["w_enc"].T,                              # (F, ENC)
        "b_enc": params["b_enc"],                                  # (1, ENC)
        "w_ih_t": params["w_ih"].T,                                # (ENC, 4H)
        "w_hh_t": params["w_hh"].T,                                # (H, 4H)
        "b_gates": params["b_ih"] + params["b_hh"],                # (1, 4H)
        "w_head_t": jnp.concatenate(
            [params["w_a"], params["w_c"]], axis=0).T,             # (H, A+1)
        "b_head": jnp.concatenate(
            [params["b_a"], params["b_c"]], axis=1),               # (1, A+1)
    }


def _cost_estimate(B, T):
    flops = 2 * B * T * (OBS_FEATURES * ENC
                         + ENC * 4 * HID
                         + HID * 4 * HID
                         + HID * (NUM_ACTIONS + 1))
    transcendentals = 5 * B * T * HID     # 3 sigmoid-H + 2 tanh-H per step
    weight_bytes = 4 * (OBS_FEATURES * ENC + ENC
                        + ENC * 4 * HID + 4 * HID
                        + HID * 4 * HID
                        + HID * (NUM_ACTIONS + 1) + (NUM_ACTIONS + 1))
    io_bytes = 4 * (B * T * OBS_FEATURES
                    + 2 * NUM_LAYERS * B * 2 * HID
                    + B * T * NUM_ACTIONS
                    + B * T)
    return pl.CostEstimate(flops=flops,
                           transcendentals=transcendentals,
                           bytes_accessed=weight_bytes + io_bytes)


def cartpole_recurrent_ppo_forward(prepared, obs_seq, hidden_state):
    B, T, _ = obs_seq.shape
    vmem = pl.BlockSpec(memory_space=pltpu.MemorySpace.VMEM)
    out_shapes = (
        jax.ShapeDtypeStruct((B, T, NUM_ACTIONS), jnp.float32),        # logits
        jax.ShapeDtypeStruct((B, T, 1), jnp.float32),                  # value
        jax.ShapeDtypeStruct((NUM_LAYERS, B, 2 * HID), jnp.float32),   # next hidden
    )
    return pl.pallas_call(
        ppo_net_kernel,
        out_shape=out_shapes,
        in_specs=[vmem] * 9,
        out_specs=(vmem, vmem, vmem),
        cost_estimate=_cost_estimate(B, T),
    )(obs_seq, hidden_state,
      prepared["w_enc_t"], prepared["b_enc"],
      prepared["w_ih_t"], prepared["w_hh_t"], prepared["b_gates"],
      prepared["w_head_t"], prepared["b_head"])


def init_params(key):
    """Deterministic synthetic parameters matching the PyTorch module shapes."""
    ks = jax.random.split(key, 12)

    def uni(k, shape, fan_in):
        bound = 1.0 / jnp.sqrt(jnp.float32(fan_in))
        return jax.random.uniform(k, shape, jnp.float32, -bound, bound)

    return {
        # encoding layer: Linear(obs_features, 64)
        "w_enc": uni(ks[0], (ENC, OBS_FEATURES), OBS_FEATURES),
        "b_enc": uni(ks[1], (1, ENC), OBS_FEATURES),
        # LSTM(64, 128), 1 layer
        "w_ih": uni(ks[2], (4 * HID, ENC), HID),
        "b_ih": uni(ks[3], (1, 4 * HID), HID),
        "w_hh": uni(ks[4], (4 * HID, HID), HID),
        "b_hh": uni(ks[5], (1, 4 * HID), HID),
        # actor: CategoricalPolicy(128, num_actions) -> logits linear
        "w_a": uni(ks[6], (NUM_ACTIONS, HID), HID),
        "b_a": uni(ks[7], (1, NUM_ACTIONS), HID),
        # critic: Linear(128, 1)
        "w_c": uni(ks[8], (1, HID), HID),
        "b_c": uni(ks[9], (1, 1), HID),
    }


def reference_forward(params, obs_seq, hidden_state):
    """Pure-JAX reference replicating the PyTorch forward semantics."""
    B, T, F = obs_seq.shape
    enc = jnp.maximum(obs_seq @ params["w_enc"].T + params["b_enc"][0], 0.0)
    h = hidden_state[0, :, :HID]
    c = hidden_state[0, :, HID:]
    bias = params["b_ih"][0] + params["b_hh"][0]
    outs = []
    for t in range(T):
        gates = enc[:, t, :] @ params["w_ih"].T + h @ params["w_hh"].T + bias
        i_g = jax.nn.sigmoid(gates[:, 0:HID])
        f_g = jax.nn.sigmoid(gates[:, HID:2 * HID])
        g_g = jnp.tanh(gates[:, 2 * HID:3 * HID])
        o_g = jax.nn.sigmoid(gates[:, 3 * HID:4 * HID])
        c = f_g * c + i_g * g_g
        h = o_g * jnp.tanh(c)
        outs.append(h)
    lstm_out = jnp.stack(outs, axis=1)
    logits = lstm_out @ params["w_a"].T + params["b_a"][0]
    value = lstm_out @ params["w_c"].T + params["b_c"][0]
    next_hid = jnp.concatenate([h, c], axis=-1)[None]
    return logits, value, next_hid


if __name__ == "__main__":
    key = jax.random.PRNGKey(0)
    k_params, k_obs, k_hid = jax.random.split(key, 3)

    B, T = 2, 8
    params = init_params(k_params)
    obs_seq = jax.random.normal(k_obs, (B, T, OBS_FEATURES), jnp.float32)
    hidden_state = jax.random.normal(k_hid, (NUM_LAYERS, B, 2 * HID), jnp.float32) * 0.1

    prepared = prepare_params(params)
    logits, value, next_hid = jax.block_until_ready(
        cartpole_recurrent_ppo_forward(prepared, obs_seq, hidden_state))

    ref_logits, ref_value, ref_hid = reference_forward(params, obs_seq, hidden_state)
    assert logits.shape == (B, T, NUM_ACTIONS)
    assert value.shape == (B, T, 1)
    assert next_hid.shape == (NUM_LAYERS, B, 2 * HID)
    assert jnp.allclose(logits, ref_logits, rtol=1e-4, atol=1e-4)
    assert jnp.allclose(value, ref_value, rtol=1e-4, atol=1e-4)
    assert jnp.allclose(next_hid, ref_hid, rtol=1e-4, atol=1e-4)

    print("KERNEL_OK")
</pallas_src>

<mosaic_0001>
module attributes {stable_mosaic.version = 11 : i64} {
  func.func @ppo_net_kernel(%arg0: memref<2x8x2xf32, #tpu.memory_space<vmem>>, %arg1: memref<1x2x256xf32, #tpu.memory_space<vmem>>, %arg2: memref<2x64xf32, #tpu.memory_space<vmem>>, %arg3: memref<1x64xf32, #tpu.memory_space<vmem>>, %arg4: memref<64x512xf32, #tpu.memory_space<vmem>>, %arg5: memref<128x512xf32, #tpu.memory_space<vmem>>, %arg6: memref<1x512xf32, #tpu.memory_space<vmem>>, %arg7: memref<128x3xf32, #tpu.memory_space<vmem>>, %arg8: memref<1x3xf32, #tpu.memory_space<vmem>>, %arg9: memref<2x8x2xf32, #tpu.memory_space<vmem>>, %arg10: memref<2x8x1xf32, #tpu.memory_space<vmem>>, %arg11: memref<1x2x256xf32, #tpu.memory_space<vmem>>) attributes {dimension_semantics = [], scalar_prefetch = 0 : i64, scratch_operands = 0 : i64, tpu.core_type = #tpu.core_type<tc>} {
    %c0 = arith.constant 0 : index
    %c0_0 = arith.constant 0 : index
    %c0_1 = arith.constant 0 : index
    %0 = vector.load %arg0[%c0, %c0_0, %c0_1] : memref<2x8x2xf32, #tpu.memory_space<vmem>>, vector<2x8x2xf32>
    %1 = vector.shape_cast %0 : vector<2x8x2xf32> to vector<16x2xf32>
    %c0_2 = arith.constant 0 : index
    %c0_3 = arith.constant 0 : index
    %2 = vector.load %arg2[%c0_2, %c0_3] : memref<2x64xf32, #tpu.memory_space<vmem>>, vector<2x64xf32>
    %cst = arith.constant dense<0.000000e+00> : vector<16x64xf32>
    %3 = tpu.matmul %1, %2, %cst {dimension_numbers = #tpu.dot_dimension_numbers<[1], [0], [0], [1], [0, 0, 1, 1], [], []>} : vector<16x2xf32>, vector<2x64xf32>, vector<16x64xf32> -> vector<16x64xf32>
    %c0_4 = arith.constant 0 : index
    %c0_5 = arith.constant 0 : index
    %4 = vector.load %arg3[%c0_4, %c0_5] : memref<1x64xf32, #tpu.memory_space<vmem>>, vector<1x64xf32>
    %5 = vector.broadcast %4 : vector<1x64xf32> to vector<16x64xf32>
    %6 = arith.addf %3, %5 : vector<16x64xf32>
    %cst_6 = arith.constant 0.000000e+00 : f32
    %7 = vector.broadcast %cst_6 : f32 to vector<16x64xf32>
    %8 = arith.maximumf %6, %7 : vector<16x64xf32>
    %c0_7 = arith.constant 0 : index
    %c0_8 = arith.constant 0 : index
    %9 = vector.load %arg4[%c0_7, %c0_8] : memref<64x512xf32, #tpu.memory_space<vmem>>, vector<64x512xf32>
    %cst_9 = arith.constant dense<0.000000e+00> : vector<16x512xf32>
    %10 = tpu.matmul %8, %9, %cst_9 {dimension_numbers = #tpu.dot_dimension_numbers<[1], [0], [0], [1], [0, 0, 1, 1], [], []>} : vector<16x64xf32>, vector<64x512xf32>, vector<16x512xf32> -> vector<16x512xf32>
    %c0_10 = arith.constant 0 : index
    %c0_11 = arith.constant 0 : index
    %11 = vector.load %arg6[%c0_10, %c0_11] : memref<1x512xf32, #tpu.memory_space<vmem>>, vector<1x512xf32>
    %12 = vector.broadcast %11 : vector<1x512xf32> to vector<16x512xf32>
    %13 = arith.addf %10, %12 : vector<16x512xf32>
    %14 = vector.shape_cast %13 : vector<16x512xf32> to vector<2x8x512xf32>
    %c0_12 = arith.constant 0 : index
    %c0_13 = arith.constant 0 : index
    %c0_14 = arith.constant 0 : index
    %15 = vector.load %arg1[%c0_12, %c0_13, %c0_14] : memref<1x2x256xf32, #tpu.memory_space<vmem>>, vector<1x2x256xf32>
    %16 = vector.extract_strided_slice %15 {offsets = [0, 0, 0], sizes = [1, 2, 128], strides = [1, 1, 1]} : vector<1x2x256xf32> to vector<1x2x128xf32>
    %17 = vector.shape_cast %16 : vector<1x2x128xf32> to vector<2x128xf32>
    %18 = vector.extract_strided_slice %15 {offsets = [0, 0, 128], sizes = [1, 2, 128], strides = [1, 1, 1]} : vector<1x2x256xf32> to vector<1x2x128xf32>
    %19 = vector.shape_cast %18 : vector<1x2x128xf32> to vector<2x128xf32>
    %c0_15 = arith.constant 0 : index
    %c0_16 = arith.constant 0 : index
    %20 = vector.load %arg5[%c0_15, %c0_16] : memref<128x512xf32, #tpu.memory_space<vmem>>, vector<128x512xf32>
    %21 = vector.extract_strided_slice %14 {offsets = [0, 0, 0], sizes = [2, 1, 512], strides = [1, 1, 1]} : vector<2x8x512xf32> to vector<2x1x512xf32>
    %22 = vector.shape_cast %21 : vector<2x1x512xf32> to vector<2x512xf32>
    %cst_17 = arith.constant dense<0.000000e+00> : vector<2x512xf32>
    %23 = tpu.matmul %17, %20, %cst_17 {dimension_numbers = #tpu.dot_dimension_numbers<[1], [0], [0], [1], [0, 0, 1, 1], [], []>} : vector<2x128xf32>, vector<128x512xf32>, vector<2x512xf32> -> vector<2x512xf32>
    %24 = arith.addf %22, %23 : vector<2x512xf32>
    %25 = vector.extract_strided_slice %24 {offsets = [0, 0], sizes = [2, 256], strides = [1, 1]} : vector<2x512xf32> to vector<2x256xf32>
    %26 = arith.negf %25 : vector<2x256xf32>
    %27 = math.exp %26 : vector<2x256xf32>
    %cst_18 = arith.constant 1.000000e+00 : f32
    %28 = vector.broadcast %cst_18 : f32 to vector<2x256xf32>
    %29 = arith.addf %28, %27 : vector<2x256xf32>
    %30 = arith.divf %28, %29 : vector<2x256xf32>
    %31 = vector.extract_strided_slice %30 {offsets = [0, 0], sizes = [2, 128], strides = [1, 1]} : vector<2x256xf32> to vector<2x128xf32>
    %32 = vector.extract_strided_slice %30 {offsets = [0, 128], sizes = [2, 128], strides = [1, 1]} : vector<2x256xf32> to vector<2x128xf32>
    %33 = vector.extract_strided_slice %24 {offsets = [0, 256], sizes = [2, 128], strides = [1, 1]} : vector<2x512xf32> to vector<2x128xf32>
    %34 = math.tanh %33 : vector<2x128xf32>
    %35 = vector.extract_strided_slice %24 {offsets = [0, 384], sizes = [2, 128], strides = [1, 1]} : vector<2x512xf32> to vector<2x128xf32>
    %36 = arith.negf %35 : vector<2x128xf32>
    %37 = math.exp %36 : vector<2x128xf32>
    %cst_19 = arith.constant 1.000000e+00 : f32
    %38 = vector.broadcast %cst_19 : f32 to vector<2x128xf32>
    %39 = arith.addf %38, %37 : vector<2x128xf32>
    %40 = arith.divf %38, %39 : vector<2x128xf32>
    %41 = arith.mulf %32, %19 : vector<2x128xf32>
    %42 = arith.mulf %31, %34 : vector<2x128xf32>
    %43 = arith.addf %41, %42 : vector<2x128xf32>
    %44 = math.tanh %43 : vector<2x128xf32>
    %45 = arith.mulf %40, %44 : vector<2x128xf32>
    %46 = vector.extract_strided_slice %14 {offsets = [0, 1, 0], sizes = [2, 1, 512], strides = [1, 1, 1]} : vector<2x8x512xf32> to vector<2x1x512xf32>
    %47 = vector.shape_cast %46 : vector<2x1x512xf32> to vector<2x512xf32>
    %cst_20 = arith.constant dense<0.000000e+00> : vector<2x512xf32>
    %48 = tpu.matmul %45, %20, %cst_20 {dimension_numbers = #tpu.dot_dimension_numbers<[1], [0], [0], [1], [0, 0, 1, 1], [], []>} : vector<2x128xf32>, vector<128x512xf32>, vector<2x512xf32> -> vector<2x512xf32>
    %49 = arith.addf %47, %48 : vector<2x512xf32>
    %50 = vector.extract_strided_slice %49 {offsets = [0, 0], sizes = [2, 256], strides = [1, 1]} : vector<2x512xf32> to vector<2x256xf32>
    %51 = arith.negf %50 : vector<2x256xf32>
    %52 = math.exp %51 : vector<2x256xf32>
    %cst_21 = arith.constant 1.000000e+00 : f32
    %53 = vector.broadcast %cst_21 : f32 to vector<2x256xf32>
    %54 = arith.addf %53, %52 : vector<2x256xf32>
    %55 = arith.divf %53, %54 : vector<2x256xf32>
    %56 = vector.extract_strided_slice %55 {offsets = [0, 0], sizes = [2, 128], strides = [1, 1]} : vector<2x256xf32> to vector<2x128xf32>
    %57 = vector.extract_strided_slice %55 {offsets = [0, 128], sizes = [2, 128], strides = [1, 1]} : vector<2x256xf32> to vector<2x128xf32>
    %58 = vector.extract_strided_slice %49 {offsets = [0, 256], sizes = [2, 128], strides = [1, 1]} : vector<2x512xf32> to vector<2x128xf32>
    %59 = math.tanh %58 : vector<2x128xf32>
    %60 = vector.extract_strided_slice %49 {offsets = [0, 384], sizes = [2, 128], strides = [1, 1]} : vector<2x512xf32> to vector<2x128xf32>
    %61 = arith.negf %60 : vector<2x128xf32>
    %62 = math.exp %61 : vector<2x128xf32>
    %cst_22 = arith.constant 1.000000e+00 : f32
    %63 = vector.broadcast %cst_22 : f32 to vector<2x128xf32>
    %64 = arith.addf %63, %62 : vector<2x128xf32>
    %65 = arith.divf %63, %64 : vector<2x128xf32>
    %66 = arith.mulf %57, %43 : vector<2x128xf32>
    %67 = arith.mulf %56, %59 : vector<2x128xf32>
    %68 = arith.addf %66, %67 : vector<2x128xf32>
    %69 = math.tanh %68 : vector<2x128xf32>
    %70 = arith.mulf %65, %69 : vector<2x128xf32>
    %71 = vector.extract_strided_slice %14 {offsets = [0, 2, 0], sizes = [2, 1, 512], strides = [1, 1, 1]} : vector<2x8x512xf32> to vector<2x1x512xf32>
    %72 = vector.shape_cast %71 : vector<2x1x512xf32> to vector<2x512xf32>
    %cst_23 = arith.constant dense<0.000000e+00> : vector<2x512xf32>
    %73 = tpu.matmul %70, %20, %cst_23 {dimension_numbers = #tpu.dot_dimension_numbers<[1], [0], [0], [1], [0, 0, 1, 1], [], []>} : vector<2x128xf32>, vector<128x512xf32>, vector<2x512xf32> -> vector<2x512xf32>
    %74 = arith.addf %72, %73 : vector<2x512xf32>
    %75 = vector.extract_strided_slice %74 {offsets = [0, 0], sizes = [2, 256], strides = [1, 1]} : vector<2x512xf32> to vector<2x256xf32>
    %76 = arith.negf %75 : vector<2x256xf32>
    %77 = math.exp %76 : vector<2x256xf32>
    %cst_24 = arith.constant 1.000000e+00 : f32
    %78 = vector.broadcast %cst_24 : f32 to vector<2x256xf32>
    %79 = arith.addf %78, %77 : vector<2x256xf32>
    %80 = arith.divf %78, %79 : vector<2x256xf32>
    %81 = vector.extract_strided_slice %80 {offsets = [0, 0], sizes = [2, 128], strides = [1, 1]} : vector<2x256xf32> to vector<2x128xf32>
    %82 = vector.extract_strided_slice %80 {offsets = [0, 128], sizes = [2, 128], strides = [1, 1]} : vector<2x256xf32> to vector<2x128xf32>
    %83 = vector.extract_strided_slice %74 {offsets = [0, 256], sizes = [2, 128], strides = [1, 1]} : vector<2x512xf32> to vector<2x128xf32>
    %84 = math.tanh %83 : vector<2x128xf32>
    %85 = vector.extract_strided_slice %74 {offsets = [0, 384], sizes = [2, 128], strides = [1, 1]} : vector<2x512xf32> to vector<2x128xf32>
    %86 = arith.negf %85 : vector<2x128xf32>
    %87 = math.exp %86 : vector<2x128xf32>
    %cst_25 = arith.constant 1.000000e+00 : f32
    %88 = vector.broadcast %cst_25 : f32 to vector<2x128xf32>
    %89 = arith.addf %88, %87 : vector<2x128xf32>
    %90 = arith.divf %88, %89 : vector<2x128xf32>
    %91 = arith.mulf %82, %68 : vector<2x128xf32>
    %92 = arith.mulf %81, %84 : vector<2x128xf32>
    %93 = arith.addf %91, %92 : vector<2x128xf32>
    %94 = math.tanh %93 : vector<2x128xf32>
    %95 = arith.mulf %90, %94 : vector<2x128xf32>
    %96 = vector.extract_strided_slice %14 {offsets = [0, 3, 0], sizes = [2, 1, 512], strides = [1, 1, 1]} : vector<2x8x512xf32> to vector<2x1x512xf32>
    %97 = vector.shape_cast %96 : vector<2x1x512xf32> to vector<2x512xf32>
    %cst_26 = arith.constant dense<0.000000e+00> : vector<2x512xf32>
    %98 = tpu.matmul %95, %20, %cst_26 {dimension_numbers = #tpu.dot_dimension_numbers<[1], [0], [0], [1], [0, 0, 1, 1], [], []>} : vector<2x128xf32>, vector<128x512xf32>, vector<2x512xf32> -> vector<2x512xf32>
    %99 = arith.addf %97, %98 : vector<2x512xf32>
    %100 = vector.extract_strided_slice %99 {offsets = [0, 0], sizes = [2, 256], strides = [1, 1]} : vector<2x512xf32> to vector<2x256xf32>
    %101 = arith.negf %100 : vector<2x256xf32>
    %102 = math.exp %101 : vector<2x256xf32>
    %cst_27 = arith.constant 1.000000e+00 : f32
    %103 = vector.broadcast %cst_27 : f32 to vector<2x256xf32>
    %104 = arith.addf %103, %102 : vector<2x256xf32>
    %105 = arith.divf %103, %104 : vector<2x256xf32>
    %106 = vector.extract_strided_slice %105 {offsets = [0, 0], sizes = [2, 128], strides = [1, 1]} : vector<2x256xf32> to vector<2x128xf32>
    %107 = vector.extract_strided_slice %105 {offsets = [0, 128], sizes = [2, 128], strides = [1, 1]} : vector<2x256xf32> to vector<2x128xf32>
    %108 = vector.extract_strided_slice %99 {offsets = [0, 256], sizes = [2, 128], strides = [1, 1]} : vector<2x512xf32> to vector<2x128xf32>
    %109 = math.tanh %108 : vector<2x128xf32>
    %110 = vector.extract_strided_slice %99 {offsets = [0, 384], sizes = [2, 128], strides = [1, 1]} : vector<2x512xf32> to vector<2x128xf32>
    %111 = arith.negf %110 : vector<2x128xf32>
    %112 = math.exp %111 : vector<2x128xf32>
    %cst_28 = arith.constant 1.000000e+00 : f32
    %113 = vector.broadcast %cst_28 : f32 to vector<2x128xf32>
    %114 = arith.addf %113, %112 : vector<2x128xf32>
    %115 = arith.divf %113, %114 : vector<2x128xf32>
    %116 = arith.mulf %107, %93 : vector<2x128xf32>
    %117 = arith.mulf %106, %109 : vector<2x128xf32>
    %118 = arith.addf %116, %117 : vector<2x128xf32>
    %119 = math.tanh %118 : vector<2x128xf32>
    %120 = arith.mulf %115, %119 : vector<2x128xf32>
    %121 = vector.extract_strided_slice %14 {offsets = [0, 4, 0], sizes = [2, 1, 512], strides = [1, 1, 1]} : vector<2x8x512xf32> to vector<2x1x512xf32>
    %122 = vector.shape_cast %121 : vector<2x1x512xf32> to vector<2x512xf32>
    %cst_29 = arith.constant dense<0.000000e+00> : vector<2x512xf32>
    %123 = tpu.matmul %120, %20, %cst_29 {dimension_numbers = #tpu.dot_dimension_numbers<[1], [0], [0], [1], [0, 0, 1, 1], [], []>} : vector<2x128xf32>, vector<128x512xf32>, vector<2x512xf32> -> vector<2x512xf32>
    %124 = arith.addf %122, %123 : vector<2x512xf32>
    %125 = vector.extract_strided_slice %124 {offsets = [0, 0], sizes = [2, 256], strides = [1, 1]} : vector<2x512xf32> to vector<2x256xf32>
    %126 = arith.negf %125 : vector<2x256xf32>
    %127 = math.exp %126 : vector<2x256xf32>
    %cst_30 = arith.constant 1.000000e+00 : f32
    %128 = vector.broadcast %cst_30 : f32 to vector<2x256xf32>
    %129 = arith.addf %128, %127 : vector<2x256xf32>
    %130 = arith.divf %128, %129 : vector<2x256xf32>
    %131 = vector.extract_strided_slice %130 {offsets = [0, 0], sizes = [2, 128], strides = [1, 1]} : vector<2x256xf32> to vector<2x128xf32>
    %132 = vector.extract_strided_slice %130 {offsets = [0, 128], sizes = [2, 128], strides = [1, 1]} : vector<2x256xf32> to vector<2x128xf32>
    %133 = vector.extract_strided_slice %124 {offsets = [0, 256], sizes = [2, 128], strides = [1, 1]} : vector<2x512xf32> to vector<2x128xf32>
    %134 = math.tanh %133 : vector<2x128xf32>
    %135 = vector.extract_strided_slice %124 {offsets = [0, 384], sizes = [2, 128], strides = [1, 1]} : vector<2x512xf32> to vector<2x128xf32>
    %136 = arith.negf %135 : vector<2x128xf32>
    %137 = math.exp %136 : vector<2x128xf32>
    %cst_31 = arith.constant 1.000000e+00 : f32
    %138 = vector.broadcast %cst_31 : f32 to vector<2x128xf32>
    %139 = arith.addf %138, %137 : vector<2x128xf32>
    %140 = arith.divf %138, %139 : vector<2x128xf32>
    %141 = arith.mulf %132, %118 : vector<2x128xf32>
    %142 = arith.mulf %131, %134 : vector<2x128xf32>
    %143 = arith.addf %141, %142 : vector<2x128xf32>
    %144 = math.tanh %143 : vector<2x128xf32>
    %145 = arith.mulf %140, %144 : vector<2x128xf32>
    %146 = vector.extract_strided_slice %14 {offsets = [0, 5, 0], sizes = [2, 1, 512], strides = [1, 1, 1]} : vector<2x8x512xf32> to vector<2x1x512xf32>
    %147 = vector.shape_cast %146 : vector<2x1x512xf32> to vector<2x512xf32>
    %cst_32 = arith.constant dense<0.000000e+00> : vector<2x512xf32>
    %148 = tpu.matmul %145, %20, %cst_32 {dimension_numbers = #tpu.dot_dimension_numbers<[1], [0], [0], [1], [0, 0, 1, 1], [], []>} : vector<2x128xf32>, vector<128x512xf32>, vector<2x512xf32> -> vector<2x512xf32>
    %149 = arith.addf %147, %148 : vector<2x512xf32>
    %150 = vector.extract_strided_slice %149 {offsets = [0, 0], sizes = [2, 256], strides = [1, 1]} : vector<2x512xf32> to vector<2x256xf32>
    %151 = arith.negf %150 : vector<2x256xf32>
    %152 = math.exp %151 : vector<2x256xf32>
    %cst_33 = arith.constant 1.000000e+00 : f32
    %153 = vector.broadcast %cst_33 : f32 to vector<2x256xf32>
    %154 = arith.addf %153, %152 : vector<2x256xf32>
    %155 = arith.divf %153, %154 : vector<2x256xf32>
    %156 = vector.extract_strided_slice %155 {offsets = [0, 0], sizes = [2, 128], strides = [1, 1]} : vector<2x256xf32> to vector<2x128xf32>
    %157 = vector.extract_strided_slice %155 {offsets = [0, 128], sizes = [2, 128], strides = [1, 1]} : vector<2x256xf32> to vector<2x128xf32>
    %158 = vector.extract_strided_slice %149 {offsets = [0, 256], sizes = [2, 128], strides = [1, 1]} : vector<2x512xf32> to vector<2x128xf32>
    %159 = math.tanh %158 : vector<2x128xf32>
    %160 = vector.extract_strided_slice %149 {offsets = [0, 384], sizes = [2, 128], strides = [1, 1]} : vector<2x512xf32> to vector<2x128xf32>
    %161 = arith.negf %160 : vector<2x128xf32>
    %162 = math.exp %161 : vector<2x128xf32>
    %cst_34 = arith.constant 1.000000e+00 : f32
    %163 = vector.broadcast %cst_34 : f32 to vector<2x128xf32>
    %164 = arith.addf %163, %162 : vector<2x128xf32>
    %165 = arith.divf %163, %164 : vector<2x128xf32>
    %166 = arith.mulf %157, %143 : vector<2x128xf32>
    %167 = arith.mulf %156, %159 : vector<2x128xf32>
    %168 = arith.addf %166, %167 : vector<2x128xf32>
    %169 = math.tanh %168 : vector<2x128xf32>
    %170 = arith.mulf %165, %169 : vector<2x128xf32>
    %171 = vector.extract_strided_slice %14 {offsets = [0, 6, 0], sizes = [2, 1, 512], strides = [1, 1, 1]} : vector<2x8x512xf32> to vector<2x1x512xf32>
    %172 = vector.shape_cast %171 : vector<2x1x512xf32> to vector<2x512xf32>
    %cst_35 = arith.constant dense<0.000000e+00> : vector<2x512xf32>
    %173 = tpu.matmul %170, %20, %cst_35 {dimension_numbers = #tpu.dot_dimension_numbers<[1], [0], [0], [1], [0, 0, 1, 1], [], []>} : vector<2x128xf32>, vector<128x512xf32>, vector<2x512xf32> -> vector<2x512xf32>
    %174 = arith.addf %172, %173 : vector<2x512xf32>
    %175 = vector.extract_strided_slice %174 {offsets = [0, 0], sizes = [2, 256], strides = [1, 1]} : vector<2x512xf32> to vector<2x256xf32>
    %176 = arith.negf %175 : vector<2x256xf32>
    %177 = math.exp %176 : vector<2x256xf32>
    %cst_36 = arith.constant 1.000000e+00 : f32
    %178 = vector.broadcast %cst_36 : f32 to vector<2x256xf32>
    %179 = arith.addf %178, %177 : vector<2x256xf32>
    %180 = arith.divf %178, %179 : vector<2x256xf32>
    %181 = vector.extract_strided_slice %180 {offsets = [0, 0], sizes = [2, 128], strides = [1, 1]} : vector<2x256xf32> to vector<2x128xf32>
    %182 = vector.extract_strided_slice %180 {offsets = [0, 128], sizes = [2, 128], strides = [1, 1]} : vector<2x256xf32> to vector<2x128xf32>
    %183 = vector.extract_strided_slice %174 {offsets = [0, 256], sizes = [2, 128], strides = [1, 1]} : vector<2x512xf32> to vector<2x128xf32>
    %184 = math.tanh %183 : vector<2x128xf32>
    %185 = vector.extract_strided_slice %174 {offsets = [0, 384], sizes = [2, 128], strides = [1, 1]} : vector<2x512xf32> to vector<2x128xf32>
    %186 = arith.negf %185 : vector<2x128xf32>
    %187 = math.exp %186 : vector<2x128xf32>
    %cst_37 = arith.constant 1.000000e+00 : f32
    %188 = vector.broadcast %cst_37 : f32 to vector<2x128xf32>
    %189 = arith.addf %188, %187 : vector<2x128xf32>
    %190 = arith.divf %188, %189 : vector<2x128xf32>
    %191 = arith.mulf %182, %168 : vector<2x128xf32>
    %192 = arith.mulf %181, %184 : vector<2x128xf32>
    %193 = arith.addf %191, %192 : vector<2x128xf32>
    %194 = math.tanh %193 : vector<2x128xf32>
    %195 = arith.mulf %190, %194 : vector<2x128xf32>
    %196 = vector.extract_strided_slice %14 {offsets = [0, 7, 0], sizes = [2, 1, 512], strides = [1, 1, 1]} : vector<2x8x512xf32> to vector<2x1x512xf32>
    %197 = vector.shape_cast %196 : vector<2x1x512xf32> to vector<2x512xf32>
    %cst_38 = arith.constant dense<0.000000e+00> : vector<2x512xf32>
    %198 = tpu.matmul %195, %20, %cst_38 {dimension_numbers = #tpu.dot_dimension_numbers<[1], [0], [0], [1], [0, 0, 1, 1], [], []>} : vector<2x128xf32>, vector<128x512xf32>, vector<2x512xf32> -> vector<2x512xf32>
    %199 = arith.addf %197, %198 : vector<2x512xf32>
    %200 = vector.extract_strided_slice %199 {offsets = [0, 0], sizes = [2, 256], strides = [1, 1]} : vector<2x512xf32> to vector<2x256xf32>
    %201 = arith.negf %200 : vector<2x256xf32>
    %202 = math.exp %201 : vector<2x256xf32>
    %cst_39 = arith.constant 1.000000e+00 : f32
    %203 = vector.broadcast %cst_39 : f32 to vector<2x256xf32>
    %204 = arith.addf %203, %202 : vector<2x256xf32>
    %205 = arith.divf %203, %204 : vector<2x256xf32>
    %206 = vector.extract_strided_slice %205 {offsets = [0, 0], sizes = [2, 128], strides = [1, 1]} : vector<2x256xf32> to vector<2x128xf32>
    %207 = vector.extract_strided_slice %205 {offsets = [0, 128], sizes = [2, 128], strides = [1, 1]} : vector<2x256xf32> to vector<2x128xf32>
    %208 = vector.extract_strided_slice %199 {offsets = [0, 256], sizes = [2, 128], strides = [1, 1]} : vector<2x512xf32> to vector<2x128xf32>
    %209 = math.tanh %208 : vector<2x128xf32>
    %210 = vector.extract_strided_slice %199 {offsets = [0, 384], sizes = [2, 128], strides = [1, 1]} : vector<2x512xf32> to vector<2x128xf32>
    %211 = arith.negf %210 : vector<2x128xf32>
    %212 = math.exp %211 : vector<2x128xf32>
    %cst_40 = arith.constant 1.000000e+00 : f32
    %213 = vector.broadcast %cst_40 : f32 to vector<2x128xf32>
    %214 = arith.addf %213, %212 : vector<2x128xf32>
    %215 = arith.divf %213, %214 : vector<2x128xf32>
    %216 = arith.mulf %207, %193 : vector<2x128xf32>
    %217 = arith.mulf %206, %209 : vector<2x128xf32>
    %218 = arith.addf %216, %217 : vector<2x128xf32>
    %219 = math.tanh %218 : vector<2x128xf32>
    %220 = arith.mulf %215, %219 : vector<2x128xf32>
    %221 = vector.shape_cast %45 : vector<2x128xf32> to vector<2x1x128xf32>
    %222 = vector.shape_cast %70 : vector<2x128xf32> to vector<2x1x128xf32>
    %223 = vector.shape_cast %95 : vector<2x128xf32> to vector<2x1x128xf32>
    %224 = vector.shape_cast %120 : vector<2x128xf32> to vector<2x1x128xf32>
    %225 = vector.shape_cast %145 : vector<2x128xf32> to vector<2x1x128xf32>
    %226 = vector.shape_cast %170 : vector<2x128xf32> to vector<2x1x128xf32>
    %227 = vector.shape_cast %195 : vector<2x128xf32> to vector<2x1x128xf32>
    %228 = vector.shape_cast %220 : vector<2x128xf32> to vector<2x1x128xf32>
    %229 = tpu.concatenate %221, %222, %223, %224, %225, %226, %227, %228 in 1 : vector<2x1x128xf32>, vector<2x1x128xf32>, vector<2x1x128xf32>, vector<2x1x128xf32>, vector<2x1x128xf32>, vector<2x1x128xf32>, vector<2x1x128xf32>, vector<2x1x128xf32> -> vector<2x8x128xf32>
    %230 = vector.shape_cast %229 : vector<2x8x128xf32> to vector<16x128xf32>
    %c0_41 = arith.constant 0 : index
    %c0_42 = arith.constant 0 : index
    %231 = vector.load %arg7[%c0_41, %c0_42] : memref<128x3xf32, #tpu.memory_space<vmem>>, vector<128x3xf32>
    %cst_43 = arith.constant dense<0.000000e+00> : vector<16x3xf32>
    %232 = tpu.matmul %230, %231, %cst_43 {dimension_numbers = #tpu.dot_dimension_numbers<[1], [0], [0], [1], [0, 0, 1, 1], [], []>} : vector<16x128xf32>, vector<128x3xf32>, vector<16x3xf32> -> vector<16x3xf32>
    %c0_44 = arith.constant 0 : index
    %c0_45 = arith.constant 0 : index
    %233 = vector.load %arg8[%c0_44, %c0_45] : memref<1x3xf32, #tpu.memory_space<vmem>>, vector<1x3xf32>
    %234 = vector.broadcast %233 : vector<1x3xf32> to vector<16x3xf32>
    %235 = arith.addf %232, %234 : vector<16x3xf32>
    %236 = vector.extract_strided_slice %235 {offsets = [0, 0], sizes = [16, 2], strides = [1, 1]} : vector<16x3xf32> to vector<16x2xf32>
    %237 = vector.shape_cast %236 : vector<16x2xf32> to vector<2x8x2xf32>
    %c0_46 = arith.constant 0 : index
    %c0_47 = arith.constant 0 : index
    %c0_48 = arith.constant 0 : index
    %238 = vector.load %arg9[%c0_46, %c0_47, %c0_48] : memref<2x8x2xf32, #tpu.memory_space<vmem>>, vector<2x8x2xf32>
    tpu.vector_store %arg9[%c0_46, %c0_47, %c0_48], %237 {strides = array<i32>} : memref<2x8x2xf32, #tpu.memory_space<vmem>>, vector<2x8x2xf32>,
    %239 = vector.extract_strided_slice %235 {offsets = [0, 2], sizes = [16, 1], strides = [1, 1]} : vector<16x3xf32> to vector<16x1xf32>
    %240 = vector.shape_cast %239 : vector<16x1xf32> to vector<2x8x1xf32>
    %c0_49 = arith.constant 0 : index
    %c0_50 = arith.constant 0 : index
    %c0_51 = arith.constant 0 : index
    %241 = vector.load %arg10[%c0_49, %c0_50, %c0_51] : memref<2x8x1xf32, #tpu.memory_space<vmem>>, vector<2x8x1xf32>
    tpu.vector_store %arg10[%c0_49, %c0_50, %c0_51], %240 {strides = array<i32>} : memref<2x8x1xf32, #tpu.memory_space<vmem>>, vector<2x8x1xf32>,
    %242 = tpu.concatenate %220, %218 in 1 : vector<2x128xf32>, vector<2x128xf32> -> vector<2x256xf32>
    %243 = vector.shape_cast %242 : vector<2x256xf32> to vector<1x2x256xf32>
    %c0_52 = arith.constant 0 : index
    %c0_53 = arith.constant 0 : index
    %c0_54 = arith.constant 0 : index
    %244 = vector.load %arg11[%c0_52, %c0_53, %c0_54] : memref<1x2x256xf32, #tpu.memory_space<vmem>>, vector<1x2x256xf32>
    tpu.vector_store %arg11[%c0_52, %c0_53, %c0_54], %243 {strides = array<i32>} : memref<1x2x256xf32, #tpu.memory_space<vmem>>, vector<1x2x256xf32>,
    return
  }
}

</mosaic_0001>

<llo_original>
// kernel: tpu_custom_call.1
$region0: #{tpu_custom_call.1}
  #allocation0 [shape = 'u32[]', space=smem, size = 0x4, offset = 0x4, fixed_abs, tag = 'smem constant byte address 0x4 - core index']
  #allocation1 [shape = 'u32[144,128]{1,0:T(1,128)}', space=vmem, size = 0x12000, scoped, tag = 'internal scratch']
  %s0 = inlined_call_operand.vmem [shape: f32[2,8,2], index: 0, kind: input, shape index: {}]
  %s1 = inlined_call_operand.vmem [shape: f32[1,2,256], index: 1, kind: input, shape index: {}]
  %s2 = inlined_call_operand.vmem [shape: f32[2,64], index: 2, kind: input, shape index: {}]
  %s3 = inlined_call_operand.vmem [shape: f32[1,64], index: 3, kind: input, shape index: {}]
  %s4 = inlined_call_operand.hbm [shape: f32[64,512], index: 4, kind: input, shape index: {}]
  %s5 = inlined_call_operand.hbm [shape: f32[128,512], index: 5, kind: input, shape index: {}]
  %s6 = inlined_call_operand.vmem [shape: f32[1,512], index: 6, kind: input, shape index: {}]
  %s7 = inlined_call_operand.vmem [shape: f32[128,3], index: 7, kind: input, shape index: {}]
  %s8 = inlined_call_operand.vmem [shape: f32[1,3], index: 8, kind: input, shape index: {}]
  %s9 = inlined_call_operand.vmem [shape: f32[2,8,2], index: 9, kind: output, shape index: {0}]
  %s10 = inlined_call_operand.vmem [shape: f32[2,8,1], index: 10, kind: output, shape index: {1}]
  %s11 = inlined_call_operand.hbm [shape: f32[1,2,256], index: 11, kind: output, shape index: {2}]
  %12 = xla_tuple %s9, %s10, %s11
  %s13 = sld [smem:[#allocation0]]
  $region70: #{tpu_custom_call.1} parent=0
    _
  %s15 = ssub.s32 1, %s13
  %s16 = scalar_select 0, %s15, %s13
  $region1: #{tpu_custom_call.1} parent=0
    #allocation2 [shape = 'u8[131072]{0}', space=vmem, size = 0x20000, scoped, tag = 'input window, operand 4, single buffered']
    #allocation3 [shape = 's32[1]{0}', space=sflag, size = 0x4, scoped, tag = 'scoped memory for tpu_custom_call.1']
    #allocation4 [shape = 's32[1]{0}', space=sflag, size = 0x4, scoped, tag = 'scoped memory for tpu_custom_call.1']
    #allocation5 [shape = 'u8[262144]{0}', space=vmem, size = 0x40000, scoped, tag = 'input window, operand 5, single buffered']
    #allocation6 [shape = 's32[1]{0}', space=sflag, size = 0x4, scoped, tag = 'scoped memory for tpu_custom_call.1']
    #allocation7 [shape = 'u8[2048]{0}', space=vmem, size = 0x800, scoped, tag = 'output window, operand 2, single buffered']
    %17 = vsyncpa [#allocation3], 0
    %18 = vsyncpa [#allocation6], 0
    %19 = vsyncpa [#allocation4], 0
    // Predicated region
    $region2: #{tpu_custom_call.1} parent=1 // pred_check
      _
    $region3: #{tpu_custom_call.1} parent=1 // pred_check_branch
      %21 = sbr.rel (0) target = $region5
    $region4: #{tpu_custom_call.1} parent=1 // pred_region
      _
    $region5: #{tpu_custom_call.1} parent=1 // pred_fallthru
      _
    // Predicated region
    $region6: #{tpu_custom_call.1} parent=1 // pred_check
      _
    $region7: #{tpu_custom_call.1} parent=1 // pred_check_branch
      %23 = sbr.rel (0) target = $region9
    $region8: #{tpu_custom_call.1} parent=1 // pred_region
      _
    $region9: #{tpu_custom_call.1} parent=1 // pred_fallthru
      _
    // Predicated region
    $region10: #{tpu_custom_call.1} parent=1 // pred_check
      _
    $region11: #{tpu_custom_call.1} parent=1 // pred_check_branch
      %25 = sbr.rel (0) target = $region13
    $region12: #{tpu_custom_call.1} parent=1 // pred_region
      _
    $region13: #{tpu_custom_call.1} parent=1 // pred_fallthru
      _
    // Predicated region
    $region14: #{tpu_custom_call.1} parent=1 // pred_check
      _
    $region15: #{tpu_custom_call.1} parent=1 // pred_check_branch
      %27 = sbr.rel (0) target = $region17
    $region16: #{tpu_custom_call.1} parent=1 // pred_region
      _
    $region17: #{tpu_custom_call.1} parent=1 // pred_fallthru
      _
    // Predicated region
    $region18: #{tpu_custom_call.1} parent=1 // pred_check
      _
    $region19: #{tpu_custom_call.1} parent=1 // pred_check_branch
      %29 = sbr.rel (0) target = $region21
    $region20: #{tpu_custom_call.1} parent=1 // pred_region
      %s31 = ssub.s32 4096, 4096
      %32 = vsyncadd [#allocation3], %s31
      %s33 = sshll.u32 [#allocation2], 4
      %s34 = int_to_ptr.vmem [resolvable:$true] %s33
      %39 = dma.hbm_to_vmem [thread:$0]  %s4, 4096, %s34, [#allocation3], 512, 512, 32
    $region21: #{tpu_custom_call.1} parent=1 // pred_fallthru
      _
    // Predicated region
    $region22: #{tpu_custom_call.1} parent=1 // pred_check
      _
    $region23: #{tpu_custom_call.1} parent=1 // pred_check_branch
      %41 = sbr.rel (0) target = $region25
    $region24: #{tpu_custom_call.1} parent=1 // pred_region
      %s43 = ssub.s32 8192, 8192
      %44 = vsyncadd [#allocation6], %s43
      %s45 = sshll.u32 [#allocation5], 4
      %s46 = int_to_ptr.vmem [resolvable:$true] %s45
      %51 = dma.hbm_to_vmem [thread:$0]  %s5, 8192, %s46, [#allocation6], 512, 512, 32
    $region25: #{tpu_custom_call.1} parent=1 // pred_fallthru
      _
    // Predicated region
    $region26: #{tpu_custom_call.1} parent=1 // pred_check
      _
    $region27: #{tpu_custom_call.1} parent=1 // pred_check_branch
      %53 = sbr.rel (0) target = $region29
    $region28: #{tpu_custom_call.1} parent=1 // pred_region
      _
    $region29: #{tpu_custom_call.1} parent=1 // pred_fallthru
      _
    // Predicated region
    $region30: #{tpu_custom_call.1} parent=1 // pred_check
      _
    $region31: #{tpu_custom_call.1} parent=1 // pred_check_branch
      %55 = sbr.rel (0) target = $region33
    $region32: #{tpu_custom_call.1} parent=1 // pred_region
      _
    $region33: #{tpu_custom_call.1} parent=1 // pred_fallthru
      _
    // Predicated region
    $region34: #{tpu_custom_call.1} parent=1 // pred_check
      _
    $region35: #{tpu_custom_call.1} parent=1 // pred_check_branch
      %57 = sbr.rel (0) target = $region37
    $region36: #{tpu_custom_call.1} parent=1 // pred_region
      _
    $region37: #{tpu_custom_call.1} parent=1 // pred_fallthru
      _
    // Predicated region
    $region38: #{tpu_custom_call.1} parent=1 // pred_check
      _
    $region39: #{tpu_custom_call.1} parent=1 // pred_check_branch
      %59 = sbr.rel (0) target = $region41
    $region40: #{tpu_custom_call.1} parent=1 // pred_region
      %60 = dma.done [#allocation3], 4096
    $region41: #{tpu_custom_call.1} parent=1 // pred_fallthru
      _
    // Predicated region
    $region42: #{tpu_custom_call.1} parent=1 // pred_check
      _
    $region43: #{tpu_custom_call.1} parent=1 // pred_check_branch
      %62 = sbr.rel (0) target = $region45
    $region44: #{tpu_custom_call.1} parent=1 // pred_region
      %63 = dma.done [#allocation6], 8192
    $region45: #{tpu_custom_call.1} parent=1 // pred_fallthru
      _
    %v64 = vld [vmem:[%s0] sm:$0xff]
    %v65 = vld [vmem:[%s0 + $0x8] sm:$0xff]
    %v66 = vld [vmem:[%s2] sm:$0x3]
    %v67 = vld [vmem:[%s3] sm:$0x1]
    %v69 = vlaneseq
    %v70 = vshrl.u32 %v69, 7
    %v71 = vsub.s32 0, %v70
    %v72 = vrot.slane %v67, %v71
    %vm74 = vcmask 15360
    %v76 = vsel %vm74, %v64, 0
    %v79 = vsel %vm74, %v65, 0
    %vm81 = vcmask 1041408
    %v83 = vsel %vm81, %v66, 0
    %85 = vmatprep.subr.mxu0 0.0
    %86 = vmatpush1.msra.mxu0 %v83
    %87 = vmatprep.subr.mxu0 0.0
    %88 = vmatpush1.msra.mxu0 0.0
    %89 = vmatprep.subr.mxu0 0.0
    %90 = vmatpush1.msra.mxu0 0.0
    %91 = vmatprep.subr.mxu0 0.0
    %92 = vmatpush1.msra.mxu0 0.0
    %93 = vmatprep.subr.mxu0 0.0
    %94 = vmatpush1.msra.mxu0 0.0
    %95 = vmatprep.subr.mxu0 0.0
    %96 = vmatpush1.msra.mxu0 0.0
    %97 = vmatprep.subr.mxu0 0.0
    %98 = vmatpush1.msra.mxu0 0.0
    %99 = vmatprep.subr.mxu0 0.0
    %100 = vmatpush1.msra.mxu0 0.0
    %101 = vmatprep.subr.mxu0 0.0
    %102 = vmatpush1.msra.mxu0 0.0
    %103 = vmatprep.subr.mxu0 0.0
    %104 = vmatpush1.msra.mxu0 0.0
    %105 = vmatprep.subr.mxu0 0.0
    %106 = vmatpush1.msra.mxu0 0.0
    %107 = vmatprep.subr.mxu0 0.0
    %108 = vmatpush1.msra.mxu0 0.0
    %109 = vmatprep.subr.mxu0 0.0
    %110 = vmatpush1.msra.mxu0 0.0
    %111 = vmatprep.subr.mxu0 0.0
    %112 = vmatpush1.msra.mxu0 0.0
    %113 = vmatprep.subr.mxu0 0.0
    %114 = vmatpush1.msra.mxu0 0.0
    %115 = vmatprep.subr.mxu0 0.0
    %116 = vmatpush1.msra.mxu0 0.0
    %117 = vmatprep.subr.mxu0 0.0
    %118 = vmatpush1.msra.mxu0 0.0
    %119 = vmatprep.subr.mxu0 0.0
    %120 = vmatpush1.msra.mxu0 0.0
    %121 = vmatprep.subr.mxu0 0.0
    %122 = vmatpush1.msra.mxu0 0.0
    %123 = vmatprep.subr.mxu0 0.0
    %124 = vmatpush1.msra.mxu0 0.0
    %125 = vmatprep.subr.mxu0 0.0
    %126 = vmatpush1.msra.mxu0 0.0
    %127 = vmatprep.subr.mxu0 0.0
    %128 = vmatpush1.msra.mxu0 0.0
    %129 = vmatprep.subr.mxu0 0.0
    %130 = vmatpush1.msra.mxu0 0.0
    %131 = vmatprep.subr.mxu0 0.0
    %132 = vmatpush1.msra.mxu0 0.0
    %133 = vmatprep.subr.mxu0 0.0
    %134 = vmatpush1.msra.mxu0 0.0
    %135 = vmatprep.subr.mxu0 0.0
    %136 = vmatpush1.msra.mxu0 0.0
    %137 = vmatprep.subr.mxu0 0.0
    %138 = vmatpush1.msra.mxu0 0.0
    %139 = vmatprep.subr.mxu0 0.0
    %140 = vmatpush1.msra.mxu0 0.0
    %141 = vmatprep.subr.mxu0 0.0
    %142 = vmatpush1.msra.mxu0 0.0
    %143 = vmatprep.subr.mxu0 0.0
    %144 = vmatpush1.msra.mxu0 0.0
    %145 = vmatprep.subr.mxu0 0.0
    %146 = vmatpush1.msra.mxu0 0.0
    %147 = vmatprep.subr.mxu0 0.0
    %148 = vmatpush1.msra.mxu0 0.0
    %149 = vmatprep.mubr.f32.mxu0 0.0
    %150 = vmatmul.mubr.f32.gmra.mrb[0].mxu0 %v76
    %v151 = vpop.f32.mrb[0].mxu0
    %v152 = vadd.f32 %v72, %v151
    %v153 = vpop.f32.mrb[0].mxu0
    %154 = vmatprep.mubr.f32.mxu0 0.0
    %155 = vmatmul.mubr.f32.gmra.mrb[0].mxu0 %v79
    %v156 = vpop.f32.mrb[0].mxu0
    %v157 = vadd.f32 %v72, %v156
    %v158 = vpop.f32.mrb[0].mxu0
    %159 = vdwg.mxu0
    %v160 = vmax.f32 %v152, 0.0
    %v161 = vmax.f32 %v157, 0.0
    %v162 = vld [vmem:[#allocation2] sm:$0xff]
    %v163 = vld [vmem:[#allocation2 + $0x8] sm:$0xff]
    %v164 = vld [vmem:[#allocation2 + $0x10] sm:$0xff]
    %v165 = vld [vmem:[#allocation2 + $0x18] sm:$0xff]
    %v166 = vld [vmem:[#allocation2 + $0x20] sm:$0xff]
    %v167 = vld [vmem:[#allocation2 + $0x28] sm:$0xff]
    %v168 = vld [vmem:[#allocation2 + $0x30] sm:$0xff]
    %v169 = vld [vmem:[#allocation2 + $0x38] sm:$0xff]
    %v170 = vld [vmem:[#allocation2 + $0x40] sm:$0xff]
    %v171 = vld [vmem:[#allocation2 + $0x48] sm:$0xff]
    %v172 = vld [vmem:[#allocation2 + $0x50] sm:$0xff]
    %v173 = vld [vmem:[#allocation2 + $0x58] sm:$0xff]
    %v174 = vld [vmem:[#allocation2 + $0x60] sm:$0xff]
    %v175 = vld [vmem:[#allocation2 + $0x68] sm:$0xff]
    %v176 = vld [vmem:[#allocation2 + $0x70] sm:$0xff]
    %v177 = vld [vmem:[#allocation2 + $0x78] sm:$0xff]
    %v178 = vld [vmem:[#allocation2 + $0x80] sm:$0xff]
    %v179 = vld [vmem:[#allocation2 + $0x88] sm:$0xff]
    %v180 = vld [vmem:[#allocation2 + $0x90] sm:$0xff]
    %v181 = vld [vmem:[#allocation2 + $0x98] sm:$0xff]
    %v182 = vld [vmem:[#allocation2 + $0xa0] sm:$0xff]
    %v183 = vld [vmem:[#allocation2 + $0xa8] sm:$0xff]
    %v184 = vld [vmem:[#allocation2 + $0xb0] sm:$0xff]
    %v185 = vld [vmem:[#allocation2 + $0xb8] sm:$0xff]
    %v186 = vld [vmem:[#allocation2 + $0xc0] sm:$0xff]
    %v187 = vld [vmem:[#allocation2 + $0xc8] sm:$0xff]
    %v188 = vld [vmem:[#allocation2 + $0xd0] sm:$0xff]
    %v189 = vld [vmem:[#allocation2 + $0xd8] sm:$0xff]
    %v190 = vld [vmem:[#allocation2 + $0xe0] sm:$0xff]
    %v191 = vld [vmem:[#allocation2 + $0xe8] sm:$0xff]
    %v192 = vld [vmem:[#allocation2 + $0xf0] sm:$0xff]
    %v193 = vld [vmem:[#allocation2 + $0xf8] sm:$0xff]
    %v194 = vld [vmem:[%s6] sm:$0xf]
    %v196 = vlaneseq
    %v197 = vshrl.u32 %v196, 7
    %v198 = vsub.s32 0, %v197
    %v199 = vrot.slane %v194, %v198
    %v200 = vlaneseq
    %v201 = vshrl.u32 %v200, 7
    %v202 = vsub.s32 1, %v201
    %v203 = vrot.slane %v194, %v202
    %v204 = vlaneseq
    %v205 = vshrl.u32 %v204, 7
    %v206 = vsub.s32 2, %v205
    %v207 = vrot.slane %v194, %v206
    %v208 = vlaneseq
    %v209 = vshrl.u32 %v208, 7
    %v210 = vsub.s32 3, %v209
    %v211 = vrot.slane %v194, %v210
    %vm216 = vcmask 523264
    %v218 = vsel %vm216, %v160, 0
    %v221 = vsel %vm216, %v161, 0
    %223 = vmatprep.subr.mxu0 %v163
    %224 = vmatpush1.msra.mxu0 %v162
    %225 = vmatprep.subr.mxu0 %v167
    %226 = vmatpush1.msra.mxu0 %v166
    %227 = vmatprep.subr.mxu0 %v171
    %228 = vmatpush1.msra.mxu0 %v170
    %229 = vmatprep.subr.mxu0 %v175
    %230 = vmatpush1.msra.mxu0 %v174
    %231 = vmatprep.subr.mxu0 %v179
    %232 = vmatpush1.msra.mxu0 %v178
    %233 = vmatprep.subr.mxu0 %v183
    %234 = vmatpush1.msra.mxu0 %v182
    %235 = vmatprep.subr.mxu0 %v187
    %236 = vmatpush1.msra.mxu0 %v186
    %237 = vmatprep.subr.mxu0 %v191
    %238 = vmatpush1.msra.mxu0 %v190
    %239 = vmatprep.subr.mxu0 0.0
    %240 = vmatpush1.msra.mxu0 0.0
    %241 = vmatprep.subr.mxu0 0.0
    %242 = vmatpush1.msra.mxu0 0.0
    %243 = vmatprep.subr.mxu0 0.0
    %244 = vmatpush1.msra.mxu0 0.0
    %245 = vmatprep.subr.mxu0 0.0
    %246 = vmatpush1.msra.mxu0 0.0
    %247 = vmatprep.subr.mxu0 0.0
    %248 = vmatpush1.msra.mxu0 0.0
    %249 = vmatprep.subr.mxu0 0.0
    %250 = vmatpush1.msra.mxu0 0.0
    %251 = vmatprep.subr.mxu0 0.0
    %252 = vmatpush1.msra.mxu0 0.0
    %253 = vmatprep.subr.mxu0 0.0
    %254 = vmatpush1.msra.mxu0 0.0
    %255 = vmatprep.subr.mxu0 0.0
    %256 = vmatpush1.msra.mxu0 0.0
    %257 = vmatprep.subr.mxu0 0.0
    %258 = vmatpush1.msra.mxu0 0.0
    %259 = vmatprep.subr.mxu0 0.0
    %260 = vmatpush1.msra.mxu0 0.0
    %261 = vmatprep.subr.mxu0 0.0
    %262 = vmatpush1.msra.mxu0 0.0
    %263 = vmatprep.subr.mxu0 0.0
    %264 = vmatpush1.msra.mxu0 0.0
    %265 = vmatprep.subr.mxu0 0.0
    %266 = vmatpush1.msra.mxu0 0.0
    %267 = vmatprep.subr.mxu0 0.0
    %268 = vmatpush1.msra.mxu0 0.0
    %269 = vmatprep.subr.mxu0 0.0
    %270 = vmatpush1.msra.mxu0 0.0
    %271 = vmatprep.subr.mxu0 0.0
    %272 = vmatpush1.msra.mxu0 0.0
    %273 = vmatprep.subr.mxu0 0.0
    %274 = vmatpush1.msra.mxu0 0.0
    %275 = vmatprep.subr.mxu0 0.0
    %276 = vmatpush1.msra.mxu0 0.0
    %277 = vmatprep.subr.mxu0 0.0
    %278 = vmatpush1.msra.mxu0 0.0
    %279 = vmatprep.subr.mxu0 0.0
    %280 = vmatpush1.msra.mxu0 0.0
    %281 = vmatprep.subr.mxu0 0.0
    %282 = vmatpush1.msra.mxu0 0.0
    %283 = vmatprep.subr.mxu0 0.0
    %284 = vmatpush1.msra.mxu0 0.0
    %285 = vmatprep.subr.mxu0 0.0
    %286 = vmatpush1.msra.mxu0 0.0
    %287 = vmatprep.mubr.f32.mxu0 0.0
    %288 = vmatmul.mubr.f32.gmra.mrb[0].mxu0 %v218
    %v289 = vpop.f32.mrb[0].mxu0
    %v290 = vadd.f32 %v199, %v289
    %v291 = vpop.f32.mrb[0].mxu0
    %v292 = vadd.f32 %v203, %v291
    %293 = vmatprep.mubr.f32.mxu0 0.0
    %294 = vmatmul.mubr.f32.gmra.mrb[0].mxu0 %v221
    %v295 = vpop.f32.mrb[0].mxu0
    %v296 = vadd.f32 %v199, %v295
    %v297 = vpop.f32.mrb[0].mxu0
    %v298 = vadd.f32 %v203, %v297
    %299 = vdwg.mxu0
    %300 = vmatprep.subr.mxu0 %v165
    %301 = vmatpush1.msra.mxu0 %v164
    %302 = vmatprep.subr.mxu0 %v169
    %303 = vmatpush1.msra.mxu0 %v168
    %304 = vmatprep.subr.mxu0 %v173
    %305 = vmatpush1.msra.mxu0 %v172
    %306 = vmatprep.subr.mxu0 %v177
    %307 = vmatpush1.msra.mxu0 %v176
    %308 = vmatprep.subr.mxu0 %v181
    %309 = vmatpush1.msra.mxu0 %v180
    %310 = vmatprep.subr.mxu0 %v185
    %311 = vmatpush1.msra.mxu0 %v184
    %312 = vmatprep.subr.mxu0 %v189
    %313 = vmatpush1.msra.mxu0 %v188
    %314 = vmatprep.subr.mxu0 %v193
    %315 = vmatpush1.msra.mxu0 %v192
    %316 = vmatprep.subr.mxu0 0.0
    %317 = vmatpush1.msra.mxu0 0.0
    %318 = vmatprep.subr.mxu0 0.0
    %319 = vmatpush1.msra.mxu0 0.0
    %320 = vmatprep.subr.mxu0 0.0
    %321 = vmatpush1.msra.mxu0 0.0
    %322 = vmatprep.subr.mxu0 0.0
    %323 = vmatpush1.msra.mxu0 0.0
    %324 = vmatprep.subr.mxu0 0.0
    %325 = vmatpush1.msra.mxu0 0.0
    %326 = vmatprep.subr.mxu0 0.0
    %327 = vmatpush1.msra.mxu0 0.0
    %328 = vmatprep.subr.mxu0 0.0
    %329 = vmatpush1.msra.mxu0 0.0
    %330 = vmatprep.subr.mxu0 0.0
    %331 = vmatpush1.msra.mxu0 0.0
    %332 = vmatprep.subr.mxu0 0.0
    %333 = vmatpush1.msra.mxu0 0.0
    %334 = vmatprep.subr.mxu0 0.0
    %335 = vmatpush1.msra.mxu0 0.0
    %336 = vmatprep.subr.mxu0 0.0
    %337 = vmatpush1.msra.mxu0 0.0
    %338 = vmatprep.subr.mxu0 0.0
    %339 = vmatpush1.msra.mxu0 0.0
    %340 = vmatprep.subr.mxu0 0.0
    %341 = vmatpush1.msra.mxu0 0.0
    %342 = vmatprep.subr.mxu0 0.0
    %343 = vmatpush1.msra.mxu0 0.0
    %344 = vmatprep.subr.mxu0 0.0
    %345 = vmatpush1.msra.mxu0 0.0
    %346 = vmatprep.subr.mxu0 0.0
    %347 = vmatpush1.msra.mxu0 0.0
    %348 = vmatprep.subr.mxu0 0.0
    %349 = vmatpush1.msra.mxu0 0.0
    %350 = vmatprep.subr.mxu0 0.0
    %351 = vmatpush1.msra.mxu0 0.0
    %352 = vmatprep.subr.mxu0 0.0
    %353 = vmatpush1.msra.mxu0 0.0
    %354 = vmatprep.subr.mxu0 0.0
    %355 = vmatpush1.msra.mxu0 0.0
    %356 = vmatprep.subr.mxu0 0.0
    %357 = vmatpush1.msra.mxu0 0.0
    %358 = vmatprep.subr.mxu0 0.0
    %359 = vmatpush1.msra.mxu0 0.0
    %360 = vmatprep.subr.mxu0 0.0
    %361 = vmatpush1.msra.mxu0 0.0
    %362 = vmatprep.subr.mxu0 0.0
    %363 = vmatpush1.msra.mxu0 0.0
    %364 = vmatprep.mubr.f32.mxu0 0.0
    %365 = vmatmul.mubr.f32.gmra.mrb[0].mxu0 %v218
    %v366 = vpop.f32.mrb[0].mxu0
    %v367 = vadd.f32 %v207, %v366
    %v368 = vpop.f32.mrb[0].mxu0
    %v369 = vadd.f32 %v211, %v368
    %370 = vmatprep.mubr.f32.mxu0 0.0
    %371 = vmatmul.mubr.f32.gmra.mrb[0].mxu0 %v221
    %v372 = vpop.f32.mrb[0].mxu0
    %v373 = vadd.f32 %v207, %v372
    %v374 = vpop.f32.mrb[0].mxu0
    %v375 = vadd.f32 %v211, %v374
    %376 = vdwg.mxu0
    %v377 = vld [vmem:[%s1] sm:$0xf]
    %v379 = vrot.slane %v377, 2
    %v380 = vld [vmem:[#allocation5] sm:$0xff]
    %v381 = vld [vmem:[#allocation5 + $0x8] sm:$0xff]
    %v382 = vld [vmem:[#allocation5 + $0x10] sm:$0xff]
    %v383 = vld [vmem:[#allocation5 + $0x18] sm:$0xff]
    %v384 = vld [vmem:[#allocation5 + $0x20] sm:$0xff]
    %v385 = vld [vmem:[#allocation5 + $0x28] sm:$0xff]
    %v386 = vld [vmem:[#allocation5 + $0x30] sm:$0xff]
    %v387 = vld [vmem:[#allocation5 + $0x38] sm:$0xff]
    %v388 = vld [vmem:[#allocation5 + $0x40] sm:$0xff]
    %v389 = vld [vmem:[#allocation5 + $0x48] sm:$0xff]
    %v390 = vld [vmem:[#allocation5 + $0x50] sm:$0xff]
    %v391 = vld [vmem:[#allocation5 + $0x58] sm:$0xff]
    %v392 = vld [vmem:[#allocation5 + $0x60] sm:$0xff]
    %v393 = vld [vmem:[#allocation5 + $0x68] sm:$0xff]
    %v394 = vld [vmem:[#allocation5 + $0x70] sm:$0xff]
    %v395 = vld [vmem:[#allocation5 + $0x78] sm:$0xff]
    %v396 = vld [vmem:[#allocation5 + $0x80] sm:$0xff]
    %v397 = vld [vmem:[#allocation5 + $0x88] sm:$0xff]
    %v398 = vld [vmem:[#allocation5 + $0x90] sm:$0xff]
    %v399 = vld [vmem:[#allocation5 + $0x98] sm:$0xff]
    %v400 = vld [vmem:[#allocation5 + $0xa0] sm:$0xff]
    %v401 = vld [vmem:[#allocation5 + $0xa8] sm:$0xff]
    %v402 = vld [vmem:[#allocation5 + $0xb0] sm:$0xff]
    %v403 = vld [vmem:[#allocation5 + $0xb8] sm:$0xff]
    %v404 = vld [vmem:[#allocation5 + $0xc0] sm:$0xff]
    %v405 = vld [vmem:[#allocation5 + $0xc8] sm:$0xff]
    %v406 = vld [vmem:[#allocation5 + $0xd0] sm:$0xff]
    %v407 = vld [vmem:[#allocation5 + $0xd8] sm:$0xff]
    %v408 = vld [vmem:[#allocation5 + $0xe0] sm:$0xff]
    %v409 = vld [vmem:[#allocation5 + $0xe8] sm:$0xff]
    %v410 = vld [vmem:[#allocation5 + $0xf0] sm:$0xff]
    %v411 = vld [vmem:[#allocation5 + $0xf8] sm:$0xff]
    %v412 = vld [vmem:[#allocation5 + $0x100] sm:$0xff]
    %v413 = vld [vmem:[#allocation5 + $0x108] sm:$0xff]
    %v414 = vld [vmem:[#allocation5 + $0x110] sm:$0xff]
    %v415 = vld [vmem:[#allocation5 + $0x118] sm:$0xff]
    %v416 = vld [vmem:[#allocation5 + $0x120] sm:$0xff]
    %v417 = vld [vmem:[#allocation5 + $0x128] sm:$0xff]
    %v418 = vld [vmem:[#allocation5 + $0x130] sm:$0xff]
    %v419 = vld [vmem:[#allocation5 + $0x138] sm:$0xff]
    %v420 = vld [vmem:[#allocation5 + $0x140] sm:$0xff]
    %v421 = vld [vmem:[#allocation5 + $0x148] sm:$0xff]
    %v422 = vld [vmem:[#allocation5 + $0x150] sm:$0xff]
    %v423 = vld [vmem:[#allocation5 + $0x158] sm:$0xff]
    %v424 = vld [vmem:[#allocation5 + $0x160] sm:$0xff]
    %v425 = vld [vmem:[#allocation5 + $0x168] sm:$0xff]
    %v426 = vld [vmem:[#allocation5 + $0x170] sm:$0xff]
    %v427 = vld [vmem:[#allocation5 + $0x178] sm:$0xff]
    %v428 = vld [vmem:[#allocation5 + $0x180] sm:$0xff]
    %v429 = vld [vmem:[#allocation5 + $0x188] sm:$0xff]
    %v430 = vld [vmem:[#allocation5 + $0x190] sm:$0xff]
    %v431 = vld [vmem:[#allocation5 + $0x198] sm:$0xff]
    %v432 = vld [vmem:[#allocation5 + $0x1a0] sm:$0xff]
    %v433 = vld [vmem:[#allocation5 + $0x1a8] sm:$0xff]
    %v434 = vld [vmem:[#allocation5 + $0x1b0] sm:$0xff]
    %v435 = vld [vmem:[#allocation5 + $0x1b8] sm:$0xff]
    %v436 = vld [vmem:[#allocation5 + $0x1c0] sm:$0xff]
    %v437 = vld [vmem:[#allocation5 + $0x1c8] sm:$0xff]
    %v438 = vld [vmem:[#allocation5 + $0x1d0] sm:$0xff]
    %v439 = vld [vmem:[#allocation5 + $0x1d8] sm:$0xff]
    %v440 = vld [vmem:[#allocation5 + $0x1e0] sm:$0xff]
    %v441 = vld [vmem:[#allocation5 + $0x1e8] sm:$0xff]
    %v442 = vld [vmem:[#allocation5 + $0x1f0] sm:$0xff]
    %v443 = vld [vmem:[#allocation5 + $0x1f8] sm:$0xff]
    %444 = vmatprep.subr.mxu0 %v381
    %445 = vmatpush1.msra.mxu0 %v380
    %446 = vmatprep.subr.mxu0 %v385
    %447 = vmatpush1.msra.mxu0 %v384
    %448 = vmatprep.subr.mxu0 %v389
    %449 = vmatpush1.msra.mxu0 %v388
    %450 = vmatprep.subr.mxu0 %v393
    %451 = vmatpush1.msra.mxu0 %v392
    %452 = vmatprep.subr.mxu0 %v397
    %453 = vmatpush1.msra.mxu0 %v396
    %454 = vmatprep.subr.mxu0 %v401
    %455 = vmatpush1.msra.mxu0 %v400
    %456 = vmatprep.subr.mxu0 %v405
    %457 = vmatpush1.msra.mxu0 %v404
    %458 = vmatprep.subr.mxu0 %v409
    %459 = vmatpush1.msra.mxu0 %v408
    %460 = vmatprep.subr.mxu0 %v413
    %461 = vmatpush1.msra.mxu0 %v412
    %462 = vmatprep.subr.mxu0 %v417
    %463 = vmatpush1.msra.mxu0 %v416
    %464 = vmatprep.subr.mxu0 %v421
    %465 = vmatpush1.msra.mxu0 %v420
    %466 = vmatprep.subr.mxu0 %v425
    %467 = vmatpush1.msra.mxu0 %v424
    %468 = vmatprep.subr.mxu0 %v429
    %469 = vmatpush1.msra.mxu0 %v428
    %470 = vmatprep.subr.mxu0 %v433
    %471 = vmatpush1.msra.mxu0 %v432
    %472 = vmatprep.subr.mxu0 %v437
    %473 = vmatpush1.msra.mxu0 %v436
    %474 = vmatprep.subr.mxu0 %v441
    %475 = vmatpush1.msra.mxu0 %v440
    %476 = vmatprep.subr.mxu0 0.0
    %477 = vmatpush1.msra.mxu0 0.0
    %478 = vmatprep.subr.mxu0 0.0
    %479 = vmatpush1.msra.mxu0 0.0
    %480 = vmatprep.subr.mxu0 0.0
    %481 = vmatpush1.msra.mxu0 0.0
    %482 = vmatprep.subr.mxu0 0.0
    %483 = vmatpush1.msra.mxu0 0.0
    %484 = vmatprep.subr.mxu0 0.0
    %485 = vmatpush1.msra.mxu0 0.0
    %486 = vmatprep.subr.mxu0 0.0
    %487 = vmatpush1.msra.mxu0 0.0
    %488 = vmatprep.subr.mxu0 0.0
    %489 = vmatpush1.msra.mxu0 0.0
    %490 = vmatprep.subr.mxu0 0.0
    %491 = vmatpush1.msra.mxu0 0.0
    %492 = vmatprep.subr.mxu0 0.0
    %493 = vmatpush1.msra.mxu0 0.0
    %494 = vmatprep.subr.mxu0 0.0
    %495 = vmatpush1.msra.mxu0 0.0
    %496 = vmatprep.subr.mxu0 0.0
    %497 = vmatpush1.msra.mxu0 0.0
    %498 = vmatprep.subr.mxu0 0.0
    %499 = vmatpush1.msra.mxu0 0.0
    %500 = vmatprep.subr.mxu0 0.0
    %501 = vmatpush1.msra.mxu0 0.0
    %502 = vmatprep.subr.mxu0 0.0
    %503 = vmatpush1.msra.mxu0 0.0
    %504 = vmatprep.subr.mxu0 0.0
    %505 = vmatpush1.msra.mxu0 0.0
    %506 = vmatprep.subr.mxu0 0.0
    %507 = vmatpush1.msra.mxu0 0.0
    %508 = vmatprep.mubr.f32.mxu0 0.0
    %509 = vmatmul.mubr.f32.gmra.mrb[0].mxu0 %v377
    %v510 = vpop.f32.mrb[0].mxu0
    %v511 = vadd.f32 0.0, %v510
    %v512 = vpop.f32.mrb[0].mxu0
    %v513 = vadd.f32 0.0, %v512
    %514 = vdwg.mxu0
    %515 = vmatprep.subr.mxu0 %v383
    %516 = vmatpush1.msra.mxu0 %v382
    %517 = vmatprep.subr.mxu0 %v387
    %518 = vmatpush1.msra.mxu0 %v386
    %519 = vmatprep.subr.mxu0 %v391
    %520 = vmatpush1.msra.mxu0 %v390
    %521 = vmatprep.subr.mxu0 %v395
    %522 = vmatpush1.msra.mxu0 %v394
    %523 = vmatprep.subr.mxu0 %v399
    %524 = vmatpush1.msra.mxu0 %v398
    %525 = vmatprep.subr.mxu0 %v403
    %526 = vmatpush1.msra.mxu0 %v402
    %527 = vmatprep.subr.mxu0 %v407
    %528 = vmatpush1.msra.mxu0 %v406
    %529 = vmatprep.subr.mxu0 %v411
    %530 = vmatpush1.msra.mxu0 %v410
    %531 = vmatprep.subr.mxu0 %v415
    %532 = vmatpush1.msra.mxu0 %v414
    %533 = vmatprep.subr.mxu0 %v419
    %534 = vmatpush1.msra.mxu0 %v418
    %535 = vmatprep.subr.mxu0 %v423
    %536 = vmatpush1.msra.mxu0 %v422
    %537 = vmatprep.subr.mxu0 %v427
    %538 = vmatpush1.msra.mxu0 %v426
    %539 = vmatprep.subr.mxu0 %v431
    %540 = vmatpush1.msra.mxu0 %v430
    %541 = vmatprep.subr.mxu0 %v435
    %542 = vmatpush1.msra.mxu0 %v434
    %543 = vmatprep.subr.mxu0 %v439
    %544 = vmatpush1.msra.mxu0 %v438
    %545 = vmatprep.subr.mxu0 %v443
    %546 = vmatpush1.msra.mxu0 %v442
    %547 = vmatprep.subr.mxu0 0.0
    %548 = vmatpush1.msra.mxu0 0.0
    %549 = vmatprep.subr.mxu0 0.0
    %550 = vmatpush1.msra.mxu0 0.0
    %551 = vmatprep.subr.mxu0 0.0
    %552 = vmatpush1.msra.mxu0 0.0
    %553 = vmatprep.subr.mxu0 0.0
    %554 = vmatpush1.msra.mxu0 0.0
    %555 = vmatprep.subr.mxu0 0.0
    %556 = vmatpush1.msra.mxu0 0.0
    %557 = vmatprep.subr.mxu0 0.0
    %558 = vmatpush1.msra.mxu0 0.0
    %559 = vmatprep.subr.mxu0 0.0
    %560 = vmatpush1.msra.mxu0 0.0
    %561 = vmatprep.subr.mxu0 0.0
    %562 = vmatpush1.msra.mxu0 0.0
    %563 = vmatprep.subr.mxu0 0.0
    %564 = vmatpush1.msra.mxu0 0.0
    %565 = vmatprep.subr.mxu0 0.0
    %566 = vmatpush1.msra.mxu0 0.0
    %567 = vmatprep.subr.mxu0 0.0
    %568 = vmatpush1.msra.mxu0 0.0
    %569 = vmatprep.subr.mxu0 0.0
    %570 = vmatpush1.msra.mxu0 0.0
    %571 = vmatprep.subr.mxu0 0.0
    %572 = vmatpush1.msra.mxu0 0.0
    %573 = vmatprep.subr.mxu0 0.0
    %574 = vmatpush1.msra.mxu0 0.0
    %575 = vmatprep.subr.mxu0 0.0
    %576 = vmatpush1.msra.mxu0 0.0
    %577 = vmatprep.subr.mxu0 0.0
    %578 = vmatpush1.msra.mxu0 0.0
    %579 = vmatprep.mubr.f32.mxu0 0.0
    %580 = vmatmul.mubr.f32.gmra.mrb[0].mxu0 %v377
    %v581 = vpop.f32.mrb[0].mxu0
    %v582 = vadd.f32 0.0, %v581
    %v583 = vpop.f32.mrb[0].mxu0
    %v584 = vadd.f32 0.0, %v583
    %585 = vdwg.mxu0
    %v590 = vrot.slane %v511, 1
    %v591 = vrot.slane %v513, 1
    %v592 = vrot.slane %v582, 1
    %v593 = vrot.slane %v584, 1
    %v602 = vadd.f32 %v290, %v511
    %v603 = vadd.f32 %v292, %v513
    %v604 = vadd.f32 %v367, %v582
    %v605 = vadd.f32 %v369, %v584
    %v606 = vadd.f32 %v296, %v590
    %v607 = vadd.f32 %v298, %v591
    %v608 = vadd.f32 %v373, %v592
    %v609 = vadd.f32 %v375, %v593
    %v610 = vxor.u32 %v602, 2147483648
    %v611 = vxor.u32 %v603, 2147483648
    %v612 = vxor.u32 %v606, 2147483648
    %v613 = vxor.u32 %v607, 2147483648
    %v614 = vmul.f32 %v610, 1.442695
    %v615 = vpow.pop %v614
    %v616 = vmul.f32 %v611, 1.442695
    %v617 = vpow.pop %v616
    %v618 = vmul.f32 %v612, 1.442695
    %v619 = vpow.pop %v618
    %v620 = vmul.f32 %v613, 1.442695
    %v621 = vpow.pop %v620
    %v622 = vadd.f32 %v615, 1.0
    %v623 = vadd.f32 %v617, 1.0
    %v624 = vadd.f32 %v619, 1.0
    %v625 = vadd.f32 %v621, 1.0
    %v626 = vrcp.pop %v622
    %v627 = vmul.f32 1.0, %v626
    %v628 = vrcp.pop %v623
    %v629 = vmul.f32 1.0, %v628
    %v630 = vrcp.pop %v624
    %v631 = vmul.f32 1.0, %v630
    %v632 = vrcp.pop %v625
    %v633 = vmul.f32 1.0, %v632
    %v634 = vtanh.pop %v604
    %v635 = vtanh.pop %v608
    %v636 = vxor.u32 %v605, 2147483648
    %v637 = vxor.u32 %v609, 2147483648
    %v638 = vmul.f32 %v636, 1.442695
    %v639 = vpow.pop %v638
    %v640 = vmul.f32 %v637, 1.442695
    %v641 = vpow.pop %v640
    %v642 = vadd.f32 %v639, 1.0
    %v643 = vadd.f32 %v641, 1.0
    %v644 = vrcp.pop %v642
    %v645 = vmul.f32 1.0, %v644
    %v646 = vrcp.pop %v643
    %v647 = vmul.f32 1.0, %v646
    %v649 = vunpack.c.l.s4 1983009808
    %v650 = vunpack.c.0.s8 %v649
    %v651 = vlaneseq
    %v652 = vshrl.u32 %v651, 7
    %v653 = vsub.s32 %v650, %v652
    %v654 = vrot.slane %v379, %v653
    %v655 = vrot.slane %v654, 1
    %v658 = vmul.f32 %v629, %v654
    %v659 = vmul.f32 %v633, %v655
    %v660 = vmul.f32 %v627, %v634
    %v661 = vmul.f32 %v631, %v635
    %v662 = vadd.f32 %v658, %v660
    %v663 = vadd.f32 %v659, %v661
    %v664 = vtanh.pop %v662
    %v665 = vtanh.pop %v663
    %v666 = vmul.f32 %v645, %v664
    %v667 = vmul.f32 %v647, %v665
    %v670 = vrot.slane %v667, 7
    %vm671 = vcmask 1041409
    %v672 = vsel %vm671, %v670, %v666
    %674 = vmatprep.subr.mxu0 %v381
    %675 = vmatpush1.msra.mxu0 %v380
    %676 = vmatprep.subr.mxu0 %v385
    %677 = vmatpush1.msra.mxu0 %v384
    %678 = vmatprep.subr.mxu0 %v389
    %679 = vmatpush1.msra.mxu0 %v388
    %680 = vmatprep.subr.mxu0 %v393
    %681 = vmatpush1.msra.mxu0 %v392
    %682 = vmatprep.subr.mxu0 %v397
    %683 = vmatpush1.msra.mxu0 %v396
    %684 = vmatprep.subr.mxu0 %v401
    %685 = vmatpush1.msra.mxu0 %v400
    %686 = vmatprep.subr.mxu0 %v405
    %687 = vmatpush1.msra.mxu0 %v404
    %688 = vmatprep.subr.mxu0 %v409
    %689 = vmatpush1.msra.mxu0 %v408
    %690 = vmatprep.subr.mxu0 %v413
    %691 = vmatpush1.msra.mxu0 %v412
    %692 = vmatprep.subr.mxu0 %v417
    %693 = vmatpush1.msra.mxu0 %v416
    %694 = vmatprep.subr.mxu0 %v421
    %695 = vmatpush1.msra.mxu0 %v420
    %696 = vmatprep.subr.mxu0 %v425
    %697 = vmatpush1.msra.mxu0 %v424
    %698 = vmatprep.subr.mxu0 %v429
    %699 = vmatpush1.msra.mxu0 %v428
    %700 = vmatprep.subr.mxu0 %v433
    %701 = vmatpush1.msra.mxu0 %v432
    %702 = vmatprep.subr.mxu0 %v437
    %703 = vmatpush1.msra.mxu0 %v436
    %704 = vmatprep.subr.mxu0 %v441
    %705 = vmatpush1.msra.mxu0 %v440
    %706 = vmatprep.subr.mxu0 0.0
    %707 = vmatpush1.msra.mxu0 0.0
    %708 = vmatprep.subr.mxu0 0.0
    %709 = vmatpush1.msra.mxu0 0.0
    %710 = vmatprep.subr.mxu0 0.0
    %711 = vmatpush1.msra.mxu0 0.0
    %712 = vmatprep.subr.mxu0 0.0
    %713 = vmatpush1.msra.mxu0 0.0
    %714 = vmatprep.subr.mxu0 0.0
    %715 = vmatpush1.msra.mxu0 0.0
    %716 = vmatprep.subr.mxu0 0.0
    %717 = vmatpush1.msra.mxu0 0.0
    %718 = vmatprep.subr.mxu0 0.0
    %719 = vmatpush1.msra.mxu0 0.0
    %720 = vmatprep.subr.mxu0 0.0
    %721 = vmatpush1.msra.mxu0 0.0
    %722 = vmatprep.subr.mxu0 0.0
    %723 = vmatpush1.msra.mxu0 0.0
    %724 = vmatprep.subr.mxu0 0.0
    %725 = vmatpush1.msra.mxu0 0.0
    %726 = vmatprep.subr.mxu0 0.0
    %727 = vmatpush1.msra.mxu0 0.0
    %728 = vmatprep.subr.mxu0 0.0
    %729 = vmatpush1.msra.mxu0 0.0
    %730 = vmatprep.subr.mxu0 0.0
    %731 = vmatpush1.msra.mxu0 0.0
    %732 = vmatprep.subr.mxu0 0.0
    %733 = vmatpush1.msra.mxu0 0.0
    %734 = vmatprep.subr.mxu0 0.0
    %735 = vmatpush1.msra.mxu0 0.0
    %736 = vmatprep.subr.mxu0 0.0
    %737 = vmatpush1.msra.mxu0 0.0
    %738 = vmatprep.mubr.f32.mxu0 0.0
    %739 = vmatmul.mubr.f32.gmra.mrb[0].mxu0 %v672
    %v740 = vpop.f32.mrb[0].mxu0
    %v741 = vadd.f32 0.0, %v740
    %v742 = vpop.f32.mrb[0].mxu0
    %v743 = vadd.f32 0.0, %v742
    %744 = vdwg.mxu0
    %745 = vmatprep.subr.mxu0 %v383
    %746 = vmatpush1.msra.mxu0 %v382
    %747 = vmatprep.subr.mxu0 %v387
    %748 = vmatpush1.msra.mxu0 %v386
    %749 = vmatprep.subr.mxu0 %v391
    %750 = vmatpush1.msra.mxu0 %v390
    %751 = vmatprep.subr.mxu0 %v395
    %752 = vmatpush1.msra.mxu0 %v394
    %753 = vmatprep.subr.mxu0 %v399
    %754 = vmatpush1.msra.mxu0 %v398
    %755 = vmatprep.subr.mxu0 %v403
    %756 = vmatpush1.msra.mxu0 %v402
    %757 = vmatprep.subr.mxu0 %v407
    %758 = vmatpush1.msra.mxu0 %v406
    %759 = vmatprep.subr.mxu0 %v411
    %760 = vmatpush1.msra.mxu0 %v410
    %761 = vmatprep.subr.mxu0 %v415
    %762 = vmatpush1.msra.mxu0 %v414
    %763 = vmatprep.subr.mxu0 %v419
    %764 = vmatpush1.msra.mxu0 %v418
    %765 = vmatprep.subr.mxu0 %v423
    %766 = vmatpush1.msra.mxu0 %v422
    %767 = vmatprep.subr.mxu0 %v427
    %768 = vmatpush1.msra.mxu0 %v426
    %769 = vmatprep.subr.mxu0 %v431
    %770 = vmatpush1.msra.mxu0 %v430
    %771 = vmatprep.subr.mxu0 %v435
    %772 = vmatpush1.msra.mxu0 %v434
    %773 = vmatprep.subr.mxu0 %v439
    %774 = vmatpush1.msra.mxu0 %v438
    %775 = vmatprep.subr.mxu0 %v443
    %776 = vmatpush1.msra.mxu0 %v442
    %777 = vmatprep.subr.mxu0 0.0
    %778 = vmatpush1.msra.mxu0 0.0
    %779 = vmatprep.subr.mxu0 0.0
    %780 = vmatpush1.msra.mxu0 0.0
    %781 = vmatprep.subr.mxu0 0.0
    %782 = vmatpush1.msra.mxu0 0.0
    %783 = vmatprep.subr.mxu0 0.0
    %784 = vmatpush1.msra.mxu0 0.0
    %785 = vmatprep.subr.mxu0 0.0
    %786 = vmatpush1.msra.mxu0 0.0
    %787 = vmatprep.subr.mxu0 0.0
    %788 = vmatpush1.msra.mxu0 0.0
    %789 = vmatprep.subr.mxu0 0.0
    %790 = vmatpush1.msra.mxu0 0.0
    %791 = vmatprep.subr.mxu0 0.0
    %792 = vmatpush1.msra.mxu0 0.0
    %793 = vmatprep.subr.mxu0 0.0
    %794 = vmatpush1.msra.mxu0 0.0
    %795 = vmatprep.subr.mxu0 0.0
    %796 = vmatpush1.msra.mxu0 0.0
    %797 = vmatprep.subr.mxu0 0.0
    %798 = vmatpush1.msra.mxu0 0.0
    %799 = vmatprep.subr.mxu0 0.0
    %800 = vmatpush1.msra.mxu0 0.0
    %801 = vmatprep.subr.mxu0 0.0
    %802 = vmatpush1.msra.mxu0 0.0
    %803 = vmatprep.subr.mxu0 0.0
    %804 = vmatpush1.msra.mxu0 0.0
    %805 = vmatprep.subr.mxu0 0.0
    %806 = vmatpush1.msra.mxu0 0.0
    %807 = vmatprep.subr.mxu0 0.0
    %808 = vmatpush1.msra.mxu0 0.0
    %809 = vmatprep.mubr.f32.mxu0 0.0
    %810 = vmatmul.mubr.f32.gmra.mrb[0].mxu0 %v672
    %v811 = vpop.f32.mrb[0].mxu0
    %v812 = vadd.f32 0.0, %v811
    %v813 = vpop.f32.mrb[0].mxu0
    %v814 = vadd.f32 0.0, %v813
    %815 = vdwg.mxu0
    %v820 = vrot.slane %v741, 7
    %v821 = vrot.slane %v743, 7
    %v822 = vrot.slane %v812, 7
    %v823 = vrot.slane %v814, 7
    %v832 = vadd.f32 %v290, %v820
    %v833 = vadd.f32 %v292, %v821
    %v834 = vadd.f32 %v367, %v822
    %v835 = vadd.f32 %v369, %v823
    %v836 = vadd.f32 %v296, %v741
    %v837 = vadd.f32 %v298, %v743
    %v838 = vadd.f32 %v373, %v812
    %v839 = vadd.f32 %v375, %v814
    %v840 = vxor.u32 %v832, 2147483648
    %v841 = vxor.u32 %v833, 2147483648
    %v842 = vxor.u32 %v836, 2147483648
    %v843 = vxor.u32 %v837, 2147483648
    %v844 = vmul.f32 %v840, 1.442695
    %v845 = vpow.pop %v844
    %v846 = vmul.f32 %v841, 1.442695
    %v847 = vpow.pop %v846
    %v848 = vmul.f32 %v842, 1.442695
    %v849 = vpow.pop %v848
    %v850 = vmul.f32 %v843, 1.442695
    %v851 = vpow.pop %v850
    %v852 = vadd.f32 %v845, 1.0
    %v853 = vadd.f32 %v847, 1.0
    %v854 = vadd.f32 %v849, 1.0
    %v855 = vadd.f32 %v851, 1.0
    %v856 = vrcp.pop %v852
    %v857 = vmul.f32 1.0, %v856
    %v858 = vrcp.pop %v853
    %v859 = vmul.f32 1.0, %v858
    %v860 = vrcp.pop %v854
    %v861 = vmul.f32 1.0, %v860
    %v862 = vrcp.pop %v855
    %v863 = vmul.f32 1.0, %v862
    %v864 = vtanh.pop %v834
    %v865 = vtanh.pop %v838
    %v866 = vxor.u32 %v835, 2147483648
    %v867 = vxor.u32 %v839, 2147483648
    %v868 = vmul.f32 %v866, 1.442695
    %v869 = vpow.pop %v868
    %v870 = vmul.f32 %v867, 1.442695
    %v871 = vpow.pop %v870
    %v872 = vadd.f32 %v869, 1.0
    %v873 = vadd.f32 %v871, 1.0
    %v874 = vrcp.pop %v872
    %v875 = vmul.f32 1.0, %v874
    %v876 = vrcp.pop %v873
    %v877 = vmul.f32 1.0, %v876
    %v880 = vrot.slane %v662, 7
    %v881 = vrot.slane %v663, 7
    %v884 = vmul.f32 %v859, %v880
    %v885 = vmul.f32 %v863, %v881
    %v886 = vmul.f32 %v857, %v864
    %v887 = vmul.f32 %v861, %v865
    %v888 = vadd.f32 %v884, %v886
    %v889 = vadd.f32 %v885, %v887
    %v890 = vtanh.pop %v888
    %v891 = vtanh.pop %v889
    %v892 = vmul.f32 %v875, %v890
    %v893 = vmul.f32 %v877, %v891
    %v896 = vrot.slane %v892, 1
    %v897 = vsel %vm671, %v893, %v896
    %899 = vmatprep.subr.mxu0 %v381
    %900 = vmatpush1.msra.mxu0 %v380
    %901 = vmatprep.subr.mxu0 %v385
    %902 = vmatpush1.msra.mxu0 %v384
    %903 = vmatprep.subr.mxu0 %v389
    %904 = vmatpush1.msra.mxu0 %v388
    %905 = vmatprep.subr.mxu0 %v393
    %906 = vmatpush1.msra.mxu0 %v392
    %907 = vmatprep.subr.mxu0 %v397
    %908 = vmatpush1.msra.mxu0 %v396
    %909 = vmatprep.subr.mxu0 %v401
    %910 = vmatpush1.msra.mxu0 %v400
    %911 = vmatprep.subr.mxu0 %v405
    %912 = vmatpush1.msra.mxu0 %v404
    %913 = vmatprep.subr.mxu0 %v409
    %914 = vmatpush1.msra.mxu0 %v408
    %915 = vmatprep.subr.mxu0 %v413
    %916 = vmatpush1.msra.mxu0 %v412
    %917 = vmatprep.subr.mxu0 %v417
    %918 = vmatpush1.msra.mxu0 %v416
    %919 = vmatprep.subr.mxu0 %v421
    %920 = vmatpush1.msra.mxu0 %v420
    %921 = vmatprep.subr.mxu0 %v425
    %922 = vmatpush1.msra.mxu0 %v424
    %923 = vmatprep.subr.mxu0 %v429
    %924 = vmatpush1.msra.mxu0 %v428
    %925 = vmatprep.subr.mxu0 %v433
    %926 = vmatpush1.msra.mxu0 %v432
    %927 = vmatprep.subr.mxu0 %v437
    %928 = vmatpush1.msra.mxu0 %v436
    %929 = vmatprep.subr.mxu0 %v441
    %930 = vmatpush1.msra.mxu0 %v440
    %931 = vmatprep.subr.mxu0 0.0
    %932 = vmatpush1.msra.mxu0 0.0
    %933 = vmatprep.subr.mxu0 0.0
    %934 = vmatpush1.msra.mxu0 0.0
    %935 = vmatprep.subr.mxu0 0.0
    %936 = vmatpush1.msra.mxu0 0.0
    %937 = vmatprep.subr.mxu0 0.0
    %938 = vmatpush1.msra.mxu0 0.0
    %939 = vmatprep.subr.mxu0 0.0
    %940 = vmatpush1.msra.mxu0 0.0
    %941 = vmatprep.subr.mxu0 0.0
    %942 = vmatpush1.msra.mxu0 0.0
    %943 = vmatprep.subr.mxu0 0.0
    %944 = vmatpush1.msra.mxu0 0.0
    %945 = vmatprep.subr.mxu0 0.0
    %946 = vmatpush1.msra.mxu0 0.0
    %947 = vmatprep.subr.mxu0 0.0
    %948 = vmatpush1.msra.mxu0 0.0
    %949 = vmatprep.subr.mxu0 0.0
    %950 = vmatpush1.msra.mxu0 0.0
    %951 = vmatprep.subr.mxu0 0.0
    %952 = vmatpush1.msra.mxu0 0.0
    %953 = vmatprep.subr.mxu0 0.0
    %954 = vmatpush1.msra.mxu0 0.0
    %955 = vmatprep.subr.mxu0 0.0
    %956 = vmatpush1.msra.mxu0 0.0
    %957 = vmatprep.subr.mxu0 0.0
    %958 = vmatpush1.msra.mxu0 0.0
    %959 = vmatprep.subr.mxu0 0.0
    %960 = vmatpush1.msra.mxu0 0.0
    %961 = vmatprep.subr.mxu0 0.0
    %962 = vmatpush1.msra.mxu0 0.0
    %963 = vmatprep.mubr.f32.mxu0 0.0
    %964 = vmatmul.mubr.f32.gmra.mrb[0].mxu0 %v897
    %v965 = vpop.f32.mrb[0].mxu0
    %v966 = vadd.f32 0.0, %v965
    %v967 = vpop.f32.mrb[0].mxu0
    %v968 = vadd.f32 0.0, %v967
    %969 = vdwg.mxu0
    %970 = vmatprep.subr.mxu0 %v383
    %971 = vmatpush1.msra.mxu0 %v382
    %972 = vmatprep.subr.mxu0 %v387
    %973 = vmatpush1.msra.mxu0 %v386
    %974 = vmatprep.subr.mxu0 %v391
    %975 = vmatpush1.msra.mxu0 %v390
    %976 = vmatprep.subr.mxu0 %v395
    %977 = vmatpush1.msra.mxu0 %v394
    %978 = vmatprep.subr.mxu0 %v399
    %979 = vmatpush1.msra.mxu0 %v398
    %980 = vmatprep.subr.mxu0 %v403
    %981 = vmatpush1.msra.mxu0 %v402
    %982 = vmatprep.subr.mxu0 %v407
    %983 = vmatpush1.msra.mxu0 %v406
    %984 = vmatprep.subr.mxu0 %v411
    %985 = vmatpush1.msra.mxu0 %v410
    %986 = vmatprep.subr.mxu0 %v415
    %987 = vmatpush1.msra.mxu0 %v414
    %988 = vmatprep.subr.mxu0 %v419
    %989 = vmatpush1.msra.mxu0 %v418
    %990 = vmatprep.subr.mxu0 %v423
    %991 = vmatpush1.msra.mxu0 %v422
    %992 = vmatprep.subr.mxu0 %v427
    %993 = vmatpush1.msra.mxu0 %v426
    %994 = vmatprep.subr.mxu0 %v431
    %995 = vmatpush1.msra.mxu0 %v430
    %996 = vmatprep.subr.mxu0 %v435
    %997 = vmatpush1.msra.mxu0 %v434
    %998 = vmatprep.subr.mxu0 %v439
    %999 = vmatpush1.msra.mxu0 %v438
    %1000 = vmatprep.subr.mxu0 %v443
    %1001 = vmatpush1.msra.mxu0 %v442
    %1002 = vmatprep.subr.mxu0 0.0
    %1003 = vmatpush1.msra.mxu0 0.0
    %1004 = vmatprep.subr.mxu0 0.0
    %1005 = vmatpush1.msra.mxu0 0.0
    %1006 = vmatprep.subr.mxu0 0.0
    %1007 = vmatpush1.msra.mxu0 0.0
    %1008 = vmatprep.subr.mxu0 0.0
    %1009 = vmatpush1.msra.mxu0 0.0
    %1010 = vmatprep.subr.mxu0 0.0
    %1011 = vmatpush1.msra.mxu0 0.0
    %1012 = vmatprep.subr.mxu0 0.0
    %1013 = vmatpush1.msra.mxu0 0.0
    %1014 = vmatprep.subr.mxu0 0.0
    %1015 = vmatpush1.msra.mxu0 0.0
    %1016 = vmatprep.subr.mxu0 0.0
    %1017 = vmatpush1.msra.mxu0 0.0
    %1018 = vmatprep.subr.mxu0 0.0
    %1019 = vmatpush1.msra.mxu0 0.0
    %1020 = vmatprep.subr.mxu0 0.0
    %1021 = vmatpush1.msra.mxu0 0.0
    %1022 = vmatprep.subr.mxu0 0.0
    %1023 = vmatpush1.msra.mxu0 0.0
    %1024 = vmatprep.subr.mxu0 0.0
    %1025 = vmatpush1.msra.mxu0 0.0
    %1026 = vmatprep.subr.mxu0 0.0
    %1027 = vmatpush1.msra.mxu0 0.0
    %1028 = vmatprep.subr.mxu0 0.0
    %1029 = vmatpush1.msra.mxu0 0.0
    %1030 = vmatprep.subr.mxu0 0.0
    %1031 = vmatpush1.msra.mxu0 0.0
    %1032 = vmatprep.subr.mxu0 0.0
    %1033 = vmatpush1.msra.mxu0 0.0
    %1034 = vmatprep.mubr.f32.mxu0 0.0
    %1035 = vmatmul.mubr.f32.gmra.mrb[0].mxu0 %v897
    %v1036 = vpop.f32.mrb[0].mxu0
    %v1037 = vadd.f32 0.0, %v1036
    %v1038 = vpop.f32.mrb[0].mxu0
    %v1039 = vadd.f32 0.0, %v1038
    %1040 = vdwg.mxu0
    %v1045 = vrot.slane %v966, 6
    %v1046 = vrot.slane %v968, 6
    %v1047 = vrot.slane %v1037, 6
    %v1048 = vrot.slane %v1039, 6
    %v1049 = vrot.slane %v966, 7
    %v1050 = vrot.slane %v968, 7
    %v1051 = vrot.slane %v1037, 7
    %v1052 = vrot.slane %v1039, 7
    %v1061 = vadd.f32 %v290, %v1045
    %v1062 = vadd.f32 %v292, %v1046
    %v1063 = vadd.f32 %v367, %v1047
    %v1064 = vadd.f32 %v369, %v1048
    %v1065 = vadd.f32 %v296, %v1049
    %v1066 = vadd.f32 %v298, %v1050
    %v1067 = vadd.f32 %v373, %v1051
    %v1068 = vadd.f32 %v375, %v1052
    %v1069 = vxor.u32 %v1061, 2147483648
    %v1070 = vxor.u32 %v1062, 2147483648
    %v1071 = vxor.u32 %v1065, 2147483648
    %v1072 = vxor.u32 %v1066, 2147483648
    %v1073 = vmul.f32 %v1069, 1.442695
    %v1074 = vpow.pop %v1073
    %v1075 = vmul.f32 %v1070, 1.442695
    %v1076 = vpow.pop %v1075
    %v1077 = vmul.f32 %v1071, 1.442695
    %v1078 = vpow.pop %v1077
    %v1079 = vmul.f32 %v1072, 1.442695
    %v1080 = vpow.pop %v1079
    %v1081 = vadd.f32 %v1074, 1.0
    %v1082 = vadd.f32 %v1076, 1.0
    %v1083 = vadd.f32 %v1078, 1.0
    %v1084 = vadd.f32 %v1080, 1.0
    %v1085 = vrcp.pop %v1081
    %v1086 = vmul.f32 1.0, %v1085
    %v1087 = vrcp.pop %v1082
    %v1088 = vmul.f32 1.0, %v1087
    %v1089 = vrcp.pop %v1083
    %v1090 = vmul.f32 1.0, %v1089
    %v1091 = vrcp.pop %v1084
    %v1092 = vmul.f32 1.0, %v1091
    %v1093 = vtanh.pop %v1063
    %v1094 = vtanh.pop %v1067
    %v1095 = vxor.u32 %v1064, 2147483648
    %v1096 = vxor.u32 %v1068, 2147483648
    %v1097 = vmul.f32 %v1095, 1.442695
    %v1098 = vpow.pop %v1097
    %v1099 = vmul.f32 %v1096, 1.442695
    %v1100 = vpow.pop %v1099
    %v1101 = vadd.f32 %v1098, 1.0
    %v1102 = vadd.f32 %v1100, 1.0
    %v1103 = vrcp.pop %v1101
    %v1104 = vmul.f32 1.0, %v1103
    %v1105 = vrcp.pop %v1102
    %v1106 = vmul.f32 1.0, %v1105
    %v1109 = vrot.slane %v888, 7
    %v1110 = vrot.slane %v889, 7
    %v1113 = vmul.f32 %v1088, %v1109
    %v1114 = vmul.f32 %v1092, %v1110
    %v1115 = vmul.f32 %v1086, %v1093
    %v1116 = vmul.f32 %v1090, %v1094
    %v1117 = vadd.f32 %v1113, %v1115
    %v1118 = vadd.f32 %v1114, %v1116
    %v1119 = vtanh.pop %v1117
    %v1120 = vtanh.pop %v1118
    %v1121 = vmul.f32 %v1104, %v1119
    %v1122 = vmul.f32 %v1106, %v1120
    %v1125 = vrot.slane %v1121, 2
    %v1126 = vrot.slane %v1122, 1
    %v1127 = vsel %vm671, %v1126, %v1125
    %1129 = vmatprep.subr.mxu0 %v381
    %1130 = vmatpush1.msra.mxu0 %v380
    %1131 = vmatprep.subr.mxu0 %v385
    %1132 = vmatpush1.msra.mxu0 %v384
    %1133 = vmatprep.subr.mxu0 %v389
    %1134 = vmatpush1.msra.mxu0 %v388
    %1135 = vmatprep.subr.mxu0 %v393
    %1136 = vmatpush1.msra.mxu0 %v392
    %1137 = vmatprep.subr.mxu0 %v397
    %1138 = vmatpush1.msra.mxu0 %v396
    %1139 = vmatprep.subr.mxu0 %v401
    %1140 = vmatpush1.msra.mxu0 %v400
    %1141 = vmatprep.subr.mxu0 %v405
    %1142 = vmatpush1.msra.mxu0 %v404
    %1143 = vmatprep.subr.mxu0 %v409
    %1144 = vmatpush1.msra.mxu0 %v408
    %1145 = vmatprep.subr.mxu0 %v413
    %1146 = vmatpush1.msra.mxu0 %v412
    %1147 = vmatprep.subr.mxu0 %v417
    %1148 = vmatpush1.msra.mxu0 %v416
    %1149 = vmatprep.subr.mxu0 %v421
    %1150 = vmatpush1.msra.mxu0 %v420
    %1151 = vmatprep.subr.mxu0 %v425
    %1152 = vmatpush1.msra.mxu0 %v424
    %1153 = vmatprep.subr.mxu0 %v429
    %1154 = vmatpush1.msra.mxu0 %v428
    %1155 = vmatprep.subr.mxu0 %v433
    %1156 = vmatpush1.msra.mxu0 %v432
    %1157 = vmatprep.subr.mxu0 %v437
    %1158 = vmatpush1.msra.mxu0 %v436
    %1159 = vmatprep.subr.mxu0 %v441
    %1160 = vmatpush1.msra.mxu0 %v440
    %1161 = vmatprep.subr.mxu0 0.0
    %1162 = vmatpush1.msra.mxu0 0.0
    %1163 = vmatprep.subr.mxu0 0.0
    %1164 = vmatpush1.msra.mxu0 0.0
    %1165 = vmatprep.subr.mxu0 0.0
    %1166 = vmatpush1.msra.mxu0 0.0
    %1167 = vmatprep.subr.mxu0 0.0
    %1168 = vmatpush1.msra.mxu0 0.0
    %1169 = vmatprep.subr.mxu0 0.0
    %1170 = vmatpush1.msra.mxu0 0.0
    %1171 = vmatprep.subr.mxu0 0.0
    %1172 = vmatpush1.msra.mxu0 0.0
    %1173 = vmatprep.subr.mxu0 0.0
    %1174 = vmatpush1.msra.mxu0 0.0
    %1175 = vmatprep.subr.mxu0 0.0
    %1176 = vmatpush1.msra.mxu0 0.0
    %1177 = vmatprep.subr.mxu0 0.0
    %1178 = vmatpush1.msra.mxu0 0.0
    %1179 = vmatprep.subr.mxu0 0.0
    %1180 = vmatpush1.msra.mxu0 0.0
    %1181 = vmatprep.subr.mxu0 0.0
    %1182 = vmatpush1.msra.mxu0 0.0
    %1183 = vmatprep.subr.mxu0 0.0
    %1184 = vmatpush1.msra.mxu0 0.0
    %1185 = vmatprep.subr.mxu0 0.0
    %1186 = vmatpush1.msra.mxu0 0.0
    %1187 = vmatprep.subr.mxu0 0.0
    %1188 = vmatpush1.msra.mxu0 0.0
    %1189 = vmatprep.subr.mxu0 0.0
    %1190 = vmatpush1.msra.mxu0 0.0
    %1191 = vmatprep.subr.mxu0 0.0
    %1192 = vmatpush1.msra.mxu0 0.0
    %1193 = vmatprep.mubr.f32.mxu0 0.0
    %1194 = vmatmul.mubr.f32.gmra.mrb[0].mxu0 %v1127
    %v1195 = vpop.f32.mrb[0].mxu0
    %v1196 = vadd.f32 0.0, %v1195
    %v1197 = vpop.f32.mrb[0].mxu0
    %v1198 = vadd.f32 0.0, %v1197
    %1199 = vdwg.mxu0
    %1200 = vmatprep.subr.mxu0 %v383
    %1201 = vmatpush1.msra.mxu0 %v382
    %1202 = vmatprep.subr.mxu0 %v387
    %1203 = vmatpush1.msra.mxu0 %v386
    %1204 = vmatprep.subr.mxu0 %v391
    %1205 = vmatpush1.msra.mxu0 %v390
    %1206 = vmatprep.subr.mxu0 %v395
    %1207 = vmatpush1.msra.mxu0 %v394
    %1208 = vmatprep.subr.mxu0 %v399
    %1209 = vmatpush1.msra.mxu0 %v398
    %1210 = vmatprep.subr.mxu0 %v403
    %1211 = vmatpush1.msra.mxu0 %v402
    %1212 = vmatprep.subr.mxu0 %v407
    %1213 = vmatpush1.msra.mxu0 %v406
    %1214 = vmatprep.subr.mxu0 %v411
    %1215 = vmatpush1.msra.mxu0 %v410
    %1216 = vmatprep.subr.mxu0 %v415
    %1217 = vmatpush1.msra.mxu0 %v414
    %1218 = vmatprep.subr.mxu0 %v419
    %1219 = vmatpush1.msra.mxu0 %v418
    %1220 = vmatprep.subr.mxu0 %v423
    %1221 = vmatpush1.msra.mxu0 %v422
    %1222 = vmatprep.subr.mxu0 %v427
    %1223 = vmatpush1.msra.mxu0 %v426
    %1224 = vmatprep.subr.mxu0 %v431
    %1225 = vmatpush1.msra.mxu0 %v430
    %1226 = vmatprep.subr.mxu0 %v435
    %1227 = vmatpush1.msra.mxu0 %v434
    %1228 = vmatprep.subr.mxu0 %v439
    %1229 = vmatpush1.msra.mxu0 %v438
    %1230 = vmatprep.subr.mxu0 %v443
    %1231 = vmatpush1.msra.mxu0 %v442
    %1232 = vmatprep.subr.mxu0 0.0
    %1233 = vmatpush1.msra.mxu0 0.0
    %1234 = vmatprep.subr.mxu0 0.0
    %1235 = vmatpush1.msra.mxu0 0.0
    %1236 = vmatprep.subr.mxu0 0.0
    %1237 = vmatpush1.msra.mxu0 0.0
    %1238 = vmatprep.subr.mxu0 0.0
    %1239 = vmatpush1.msra.mxu0 0.0
    %1240 = vmatprep.subr.mxu0 0.0
    %1241 = vmatpush1.msra.mxu0 0.0
    %1242 = vmatprep.subr.mxu0 0.0
    %1243 = vmatpush1.msra.mxu0 0.0
    %1244 = vmatprep.subr.mxu0 0.0
    %1245 = vmatpush1.msra.mxu0 0.0
    %1246 = vmatprep.subr.mxu0 0.0
    %1247 = vmatpush1.msra.mxu0 0.0
    %1248 = vmatprep.subr.mxu0 0.0
    %1249 = vmatpush1.msra.mxu0 0.0
    %1250 = vmatprep.subr.mxu0 0.0
    %1251 = vmatpush1.msra.mxu0 0.0
    %1252 = vmatprep.subr.mxu0 0.0
    %1253 = vmatpush1.msra.mxu0 0.0
    %1254 = vmatprep.subr.mxu0 0.0
    %1255 = vmatpush1.msra.mxu0 0.0
    %1256 = vmatprep.subr.mxu0 0.0
    %1257 = vmatpush1.msra.mxu0 0.0
    %1258 = vmatprep.subr.mxu0 0.0
    %1259 = vmatpush1.msra.mxu0 0.0
    %1260 = vmatprep.subr.mxu0 0.0
    %1261 = vmatpush1.msra.mxu0 0.0
    %1262 = vmatprep.subr.mxu0 0.0
    %1263 = vmatpush1.msra.mxu0 0.0
    %1264 = vmatprep.mubr.f32.mxu0 0.0
    %1265 = vmatmul.mubr.f32.gmra.mrb[0].mxu0 %v1127
    %v1266 = vpop.f32.mrb[0].mxu0
    %v1267 = vadd.f32 0.0, %v1266
    %v1268 = vpop.f32.mrb[0].mxu0
    %v1269 = vadd.f32 0.0, %v1268
    %1270 = vdwg.mxu0
    %v1275 = vrot.slane %v1196, 5
    %v1276 = vrot.slane %v1198, 5
    %v1277 = vrot.slane %v1267, 5
    %v1278 = vrot.slane %v1269, 5
    %v1279 = vrot.slane %v1196, 6
    %v1280 = vrot.slane %v1198, 6
    %v1281 = vrot.slane %v1267, 6
    %v1282 = vrot.slane %v1269, 6
    %v1291 = vadd.f32 %v290, %v1275
    %v1292 = vadd.f32 %v292, %v1276
    %v1293 = vadd.f32 %v367, %v1277
    %v1294 = vadd.f32 %v369, %v1278
    %v1295 = vadd.f32 %v296, %v1279
    %v1296 = vadd.f32 %v298, %v1280
    %v1297 = vadd.f32 %v373, %v1281
    %v1298 = vadd.f32 %v375, %v1282
    %v1299 = vxor.u32 %v1291, 2147483648
    %v1300 = vxor.u32 %v1292, 2147483648
    %v1301 = vxor.u32 %v1295, 2147483648
    %v1302 = vxor.u32 %v1296, 2147483648
    %v1303 = vmul.f32 %v1299, 1.442695
    %v1304 = vpow.pop %v1303
    %v1305 = vmul.f32 %v1300, 1.442695
    %v1306 = vpow.pop %v1305
    %v1307 = vmul.f32 %v1301, 1.442695
    %v1308 = vpow.pop %v1307
    %v1309 = vmul.f32 %v1302, 1.442695
    %v1310 = vpow.pop %v1309
    %v1311 = vadd.f32 %v1304, 1.0
    %v1312 = vadd.f32 %v1306, 1.0
    %v1313 = vadd.f32 %v1308, 1.0
    %v1314 = vadd.f32 %v1310, 1.0
    %v1315 = vrcp.pop %v1311
    %v1316 = vmul.f32 1.0, %v1315
    %v1317 = vrcp.pop %v1312
    %v1318 = vmul.f32 1.0, %v1317
    %v1319 = vrcp.pop %v1313
    %v1320 = vmul.f32 1.0, %v1319
    %v1321 = vrcp.pop %v1314
    %v1322 = vmul.f32 1.0, %v1321
    %v1323 = vtanh.pop %v1293
    %v1324 = vtanh.pop %v1297
    %v1325 = vxor.u32 %v1294, 2147483648
    %v1326 = vxor.u32 %v1298, 2147483648
    %v1327 = vmul.f32 %v1325, 1.442695
    %v1328 = vpow.pop %v1327
    %v1329 = vmul.f32 %v1326, 1.442695
    %v1330 = vpow.pop %v1329
    %v1331 = vadd.f32 %v1328, 1.0
    %v1332 = vadd.f32 %v1330, 1.0
    %v1333 = vrcp.pop %v1331
    %v1334 = vmul.f32 1.0, %v1333
    %v1335 = vrcp.pop %v1332
    %v1336 = vmul.f32 1.0, %v1335
    %v1339 = vrot.slane %v1117, 7
    %v1340 = vrot.slane %v1118, 7
    %v1343 = vmul.f32 %v1318, %v1339
    %v1344 = vmul.f32 %v1322, %v1340
    %v1345 = vmul.f32 %v1316, %v1323
    %v1346 = vmul.f32 %v1320, %v1324
    %v1347 = vadd.f32 %v1343, %v1345
    %v1348 = vadd.f32 %v1344, %v1346
    %v1349 = vtanh.pop %v1347
    %v1350 = vtanh.pop %v1348
    %v1351 = vmul.f32 %v1334, %v1349
    %v1352 = vmul.f32 %v1336, %v1350
    %v1355 = vrot.slane %v1351, 3
    %v1356 = vrot.slane %v1352, 2
    %v1357 = vsel %vm671, %v1356, %v1355
    %1359 = vmatprep.subr.mxu0 %v381
    %1360 = vmatpush1.msra.mxu0 %v380
    %1361 = vmatprep.subr.mxu0 %v385
    %1362 = vmatpush1.msra.mxu0 %v384
    %1363 = vmatprep.subr.mxu0 %v389
    %1364 = vmatpush1.msra.mxu0 %v388
    %1365 = vmatprep.subr.mxu0 %v393
    %1366 = vmatpush1.msra.mxu0 %v392
    %1367 = vmatprep.subr.mxu0 %v397
    %1368 = vmatpush1.msra.mxu0 %v396
    %1369 = vmatprep.subr.mxu0 %v401
    %1370 = vmatpush1.msra.mxu0 %v400
    %1371 = vmatprep.subr.mxu0 %v405
    %1372 = vmatpush1.msra.mxu0 %v404
    %1373 = vmatprep.subr.mxu0 %v409
    %1374 = vmatpush1.msra.mxu0 %v408
    %1375 = vmatprep.subr.mxu0 %v413
    %1376 = vmatpush1.msra.mxu0 %v412
    %1377 = vmatprep.subr.mxu0 %v417
    %1378 = vmatpush1.msra.mxu0 %v416
    %1379 = vmatprep.subr.mxu0 %v421
    %1380 = vmatpush1.msra.mxu0 %v420
    %1381 = vmatprep.subr.mxu0 %v425
    %1382 = vmatpush1.msra.mxu0 %v424
    %1383 = vmatprep.subr.mxu0 %v429
    %1384 = vmatpush1.msra.mxu0 %v428
    %1385 = vmatprep.subr.mxu0 %v433
    %1386 = vmatpush1.msra.mxu0 %v432
    %1387 = vmatprep.subr.mxu0 %v437
    %1388 = vmatpush1.msra.mxu0 %v436
    %1389 = vmatprep.subr.mxu0 %v441
    %1390 = vmatpush1.msra.mxu0 %v440
    %1391 = vmatprep.subr.mxu0 0.0
    %1392 = vmatpush1.msra.mxu0 0.0
    %1393 = vmatprep.subr.mxu0 0.0
    %1394 = vmatpush1.msra.mxu0 0.0
    %1395 = vmatprep.subr.mxu0 0.0
    %1396 = vmatpush1.msra.mxu0 0.0
    %1397 = vmatprep.subr.mxu0 0.0
    %1398 = vmatpush1.msra.mxu0 0.0
    %1399 = vmatprep.subr.mxu0 0.0
    %1400 = vmatpush1.msra.mxu0 0.0
    %1401 = vmatprep.subr.mxu0 0.0
    %1402 = vmatpush1.msra.mxu0 0.0
    %1403 = vmatprep.subr.mxu0 0.0
    %1404 = vmatpush1.msra.mxu0 0.0
    %1405 = vmatprep.subr.mxu0 0.0
    %1406 = vmatpush1.msra.mxu0 0.0
    %1407 = vmatprep.subr.mxu0 0.0
    %1408 = vmatpush1.msra.mxu0 0.0
    %1409 = vmatprep.subr.mxu0 0.0
    %1410 = vmatpush1.msra.mxu0 0.0
    %1411 = vmatprep.subr.mxu0 0.0
    %1412 = vmatpush1.msra.mxu0 0.0
    %1413 = vmatprep.subr.mxu0 0.0
    %1414 = vmatpush1.msra.mxu0 0.0
    %1415 = vmatprep.subr.mxu0 0.0
    %1416 = vmatpush1.msra.mxu0 0.0
    %1417 = vmatprep.subr.mxu0 0.0
    %1418 = vmatpush1.msra.mxu0 0.0
    %1419 = vmatprep.subr.mxu0 0.0
    %1420 = vmatpush1.msra.mxu0 0.0
    %1421 = vmatprep.subr.mxu0 0.0
    %1422 = vmatpush1.msra.mxu0 0.0
    %1423 = vmatprep.mubr.f32.mxu0 0.0
    %1424 = vmatmul.mubr.f32.gmra.mrb[0].mxu0 %v1357
    %v1425 = vpop.f32.mrb[0].mxu0
    %v1426 = vadd.f32 0.0, %v1425
    %v1427 = vpop.f32.mrb[0].mxu0
    %v1428 = vadd.f32 0.0, %v1427
    %1429 = vdwg.mxu0
    %1430 = vmatprep.subr.mxu0 %v383
    %1431 = vmatpush1.msra.mxu0 %v382
    %1432 = vmatprep.subr.mxu0 %v387
    %1433 = vmatpush1.msra.mxu0 %v386
    %1434 = vmatprep.subr.mxu0 %v391
    %1435 = vmatpush1.msra.mxu0 %v390
    %1436 = vmatprep.subr.mxu0 %v395
    %1437 = vmatpush1.msra.mxu0 %v394
    %1438 = vmatprep.subr.mxu0 %v399
    %1439 = vmatpush1.msra.mxu0 %v398
    %1440 = vmatprep.subr.mxu0 %v403
    %1441 = vmatpush1.msra.mxu0 %v402
    %1442 = vmatprep.subr.mxu0 %v407
    %1443 = vmatpush1.msra.mxu0 %v406
    %1444 = vmatprep.subr.mxu0 %v411
    %1445 = vmatpush1.msra.mxu0 %v410
    %1446 = vmatprep.subr.mxu0 %v415
    %1447 = vmatpush1.msra.mxu0 %v414
    %1448 = vmatprep.subr.mxu0 %v419
    %1449 = vmatpush1.msra.mxu0 %v418
    %1450 = vmatprep.subr.mxu0 %v423
    %1451 = vmatpush1.msra.mxu0 %v422
    %1452 = vmatprep.subr.mxu0 %v427
    %1453 = vmatpush1.msra.mxu0 %v426
    %1454 = vmatprep.subr.mxu0 %v431
    %1455 = vmatpush1.msra.mxu0 %v430
    %1456 = vmatprep.subr.mxu0 %v435
    %1457 = vmatpush1.msra.mxu0 %v434
    %1458 = vmatprep.subr.mxu0 %v439
    %1459 = vmatpush1.msra.mxu0 %v438
    %1460 = vmatprep.subr.mxu0 %v443
    %1461 = vmatpush1.msra.mxu0 %v442
    %1462 = vmatprep.subr.mxu0 0.0
    %1463 = vmatpush1.msra.mxu0 0.0
    %1464 = vmatprep.subr.mxu0 0.0
    %1465 = vmatpush1.msra.mxu0 0.0
    %1466 = vmatprep.subr.mxu0 0.0
    %1467 = vmatpush1.msra.mxu0 0.0
    %1468 = vmatprep.subr.mxu0 0.0
    %1469 = vmatpush1.msra.mxu0 0.0
    %1470 = vmatprep.subr.mxu0 0.0
    %1471 = vmatpush1.msra.mxu0 0.0
    %1472 = vmatprep.subr.mxu0 0.0
    %1473 = vmatpush1.msra.mxu0 0.0
    %1474 = vmatprep.subr.mxu0 0.0
    %1475 = vmatpush1.msra.mxu0 0.0
    %1476 = vmatprep.subr.mxu0 0.0
    %1477 = vmatpush1.msra.mxu0 0.0
    %1478 = vmatprep.subr.mxu0 0.0
    %1479 = vmatpush1.msra.mxu0 0.0
    %1480 = vmatprep.subr.mxu0 0.0
    %1481 = vmatpush1.msra.mxu0 0.0
    %1482 = vmatprep.subr.mxu0 0.0
    %1483 = vmatpush1.msra.mxu0 0.0
    %1484 = vmatprep.subr.mxu0 0.0
    %1485 = vmatpush1.msra.mxu0 0.0
    %1486 = vmatprep.subr.mxu0 0.0
    %1487 = vmatpush1.msra.mxu0 0.0
    %1488 = vmatprep.subr.mxu0 0.0
    %1489 = vmatpush1.msra.mxu0 0.0
    %1490 = vmatprep.subr.mxu0 0.0
    %1491 = vmatpush1.msra.mxu0 0.0
    %1492 = vmatprep.subr.mxu0 0.0
    %1493 = vmatpush1.msra.mxu0 0.0
    %1494 = vmatprep.mubr.f32.mxu0 0.0
    %1495 = vmatmul.mubr.f32.gmra.mrb[0].mxu0 %v1357
    %v1496 = vpop.f32.mrb[0].mxu0
    %v1497 = vadd.f32 0.0, %v1496
    %v1498 = vpop.f32.mrb[0].mxu0
    %v1499 = vadd.f32 0.0, %v1498
    %1500 = vdwg.mxu0
    %v1505 = vrot.slane %v1426, 4
    %v1506 = vrot.slane %v1428, 4
    %v1507 = vrot.slane %v1497, 4
    %v1508 = vrot.slane %v1499, 4
    %v1509 = vrot.slane %v1426, 5
    %v1510 = vrot.slane %v1428, 5
    %v1511 = vrot.slane %v1497, 5
    %v1512 = vrot.slane %v1499, 5
    %v1521 = vadd.f32 %v290, %v1505
    %v1522 = vadd.f32 %v292, %v1506
    %v1523 = vadd.f32 %v367, %v1507
    %v1524 = vadd.f32 %v369, %v1508
    %v1525 = vadd.f32 %v296, %v1509
    %v1526 = vadd.f32 %v298, %v1510
    %v1527 = vadd.f32 %v373, %v1511
    %v1528 = vadd.f32 %v375, %v1512
    %v1529 = vxor.u32 %v1521, 2147483648
    %v1530 = vxor.u32 %v1522, 2147483648
    %v1531 = vxor.u32 %v1525, 2147483648
    %v1532 = vxor.u32 %v1526, 2147483648
    %v1533 = vmul.f32 %v1529, 1.442695
    %v1534 = vpow.pop %v1533
    %v1535 = vmul.f32 %v1530, 1.442695
    %v1536 = vpow.pop %v1535
    %v1537 = vmul.f32 %v1531, 1.442695
    %v1538 = vpow.pop %v1537
    %v1539 = vmul.f32 %v1532, 1.442695
    %v1540 = vpow.pop %v1539
    %v1541 = vadd.f32 %v1534, 1.0
    %v1542 = vadd.f32 %v1536, 1.0
    %v1543 = vadd.f32 %v1538, 1.0
    %v1544 = vadd.f32 %v1540, 1.0
    %v1545 = vrcp.pop %v1541
    %v1546 = vmul.f32 1.0, %v1545
    %v1547 = vrcp.pop %v1542
    %v1548 = vmul.f32 1.0, %v1547
    %v1549 = vrcp.pop %v1543
    %v1550 = vmul.f32 1.0, %v1549
    %v1551 = vrcp.pop %v1544
    %v1552 = vmul.f32 1.0, %v1551
    %v1553 = vtanh.pop %v1523
    %v1554 = vtanh.pop %v1527
    %v1555 = vxor.u32 %v1524, 2147483648
    %v1556 = vxor.u32 %v1528, 2147483648
    %v1557 = vmul.f32 %v1555, 1.442695
    %v1558 = vpow.pop %v1557
    %v1559 = vmul.f32 %v1556, 1.442695
    %v1560 = vpow.pop %v1559
    %v1561 = vadd.f32 %v1558, 1.0
    %v1562 = vadd.f32 %v1560, 1.0
    %v1563 = vrcp.pop %v1561
    %v1564 = vmul.f32 1.0, %v1563
    %v1565 = vrcp.pop %v1562
    %v1566 = vmul.f32 1.0, %v1565
    %v1569 = vrot.slane %v1347, 7
    %v1570 = vrot.slane %v1348, 7
    %v1573 = vmul.f32 %v1548, %v1569
    %v1574 = vmul.f32 %v1552, %v1570
    %v1575 = vmul.f32 %v1546, %v1553
    %v1576 = vmul.f32 %v1550, %v1554
    %v1577 = vadd.f32 %v1573, %v1575
    %v1578 = vadd.f32 %v1574, %v1576
    %v1579 = vtanh.pop %v1577
    %v1580 = vtanh.pop %v1578
    %v1581 = vmul.f32 %v1564, %v1579
    %v1582 = vmul.f32 %v1566, %v1580
    %v1585 = vrot.slane %v1581, 4
    %v1586 = vrot.slane %v1582, 3
    %v1587 = vsel %vm671, %v1586, %v1585
    %1589 = vmatprep.subr.mxu0 %v381
    %1590 = vmatpush1.msra.mxu0 %v380
    %1591 = vmatprep.subr.mxu0 %v385
    %1592 = vmatpush1.msra.mxu0 %v384
    %1593 = vmatprep.subr.mxu0 %v389
    %1594 = vmatpush1.msra.mxu0 %v388
    %1595 = vmatprep.subr.mxu0 %v393
    %1596 = vmatpush1.msra.mxu0 %v392
    %1597 = vmatprep.subr.mxu0 %v397
    %1598 = vmatpush1.msra.mxu0 %v396
    %1599 = vmatprep.subr.mxu0 %v401
    %1600 = vmatpush1.msra.mxu0 %v400
    %1601 = vmatprep.subr.mxu0 %v405
    %1602 = vmatpush1.msra.mxu0 %v404
    %1603 = vmatprep.subr.mxu0 %v409
    %1604 = vmatpush1.msra.mxu0 %v408
    %1605 = vmatprep.subr.mxu0 %v413
    %1606 = vmatpush1.msra.mxu0 %v412
    %1607 = vmatprep.subr.mxu0 %v417
    %1608 = vmatpush1.msra.mxu0 %v416
    %1609 = vmatprep.subr.mxu0 %v421
    %1610 = vmatpush1.msra.mxu0 %v420
    %1611 = vmatprep.subr.mxu0 %v425
    %1612 = vmatpush1.msra.mxu0 %v424
    %1613 = vmatprep.subr.mxu0 %v429
    %1614 = vmatpush1.msra.mxu0 %v428
    %1615 = vmatprep.subr.mxu0 %v433
    %1616 = vmatpush1.msra.mxu0 %v432
    %1617 = vmatprep.subr.mxu0 %v437
    %1618 = vmatpush1.msra.mxu0 %v436
    %1619 = vmatprep.subr.mxu0 %v441
    %1620 = vmatpush1.msra.mxu0 %v440
    %1621 = vmatprep.subr.mxu0 0.0
    %1622 = vmatpush1.msra.mxu0 0.0
    %1623 = vmatprep.subr.mxu0 0.0
    %1624 = vmatpush1.msra.mxu0 0.0
    %1625 = vmatprep.subr.mxu0 0.0
    %1626 = vmatpush1.msra.mxu0 0.0
    %1627 = vmatprep.subr.mxu0 0.0
    %1628 = vmatpush1.msra.mxu0 0.0
    %1629 = vmatprep.subr.mxu0 0.0
    %1630 = vmatpush1.msra.mxu0 0.0
    %1631 = vmatprep.subr.mxu0 0.0
    %1632 = vmatpush1.msra.mxu0 0.0
    %1633 = vmatprep.subr.mxu0 0.0
    %1634 = vmatpush1.msra.mxu0 0.0
    %1635 = vmatprep.subr.mxu0 0.0
    %1636 = vmatpush1.msra.mxu0 0.0
    %1637 = vmatprep.subr.mxu0 0.0
    %1638 = vmatpush1.msra.mxu0 0.0
    %1639 = vmatprep.subr.mxu0 0.0
    %1640 = vmatpush1.msra.mxu0 0.0
    %1641 = vmatprep.subr.mxu0 0.0
    %1642 = vmatpush1.msra.mxu0 0.0
    %1643 = vmatprep.subr.mxu0 0.0
    %1644 = vmatpush1.msra.mxu0 0.0
    %1645 = vmatprep.subr.mxu0 0.0
    %1646 = vmatpush1.msra.mxu0 0.0
    %1647 = vmatprep.subr.mxu0 0.0
    %1648 = vmatpush1.msra.mxu0 0.0
    %1649 = vmatprep.subr.mxu0 0.0
    %1650 = vmatpush1.msra.mxu0 0.0
    %1651 = vmatprep.subr.mxu0 0.0
    %1652 = vmatpush1.msra.mxu0 0.0
    %1653 = vmatprep.mubr.f32.mxu0 0.0
    %1654 = vmatmul.mubr.f32.gmra.mrb[0].mxu0 %v1587
    %v1655 = vpop.f32.mrb[0].mxu0
    %v1656 = vadd.f32 0.0, %v1655
    %v1657 = vpop.f32.mrb[0].mxu0
    %v1658 = vadd.f32 0.0, %v1657
    %1659 = vdwg.mxu0
    %1660 = vmatprep.subr.mxu0 %v383
    %1661 = vmatpush1.msra.mxu0 %v382
    %1662 = vmatprep.subr.mxu0 %v387
    %1663 = vmatpush1.msra.mxu0 %v386
    %1664 = vmatprep.subr.mxu0 %v391
    %1665 = vmatpush1.msra.mxu0 %v390
    %1666 = vmatprep.subr.mxu0 %v395
    %1667 = vmatpush1.msra.mxu0 %v394
    %1668 = vmatprep.subr.mxu0 %v399
    %1669 = vmatpush1.msra.mxu0 %v398
    %1670 = vmatprep.subr.mxu0 %v403
    %1671 = vmatpush1.msra.mxu0 %v402
    %1672 = vmatprep.subr.mxu0 %v407
    %1673 = vmatpush1.msra.mxu0 %v406
    %1674 = vmatprep.subr.mxu0 %v411
    %1675 = vmatpush1.msra.mxu0 %v410
    %1676 = vmatprep.subr.mxu0 %v415
    %1677 = vmatpush1.msra.mxu0 %v414
    %1678 = vmatprep.subr.mxu0 %v419
    %1679 = vmatpush1.msra.mxu0 %v418
    %1680 = vmatprep.subr.mxu0 %v423
    %1681 = vmatpush1.msra.mxu0 %v422
    %1682 = vmatprep.subr.mxu0 %v427
    %1683 = vmatpush1.msra.mxu0 %v426
    %1684 = vmatprep.subr.mxu0 %v431
    %1685 = vmatpush1.msra.mxu0 %v430
    %1686 = vmatprep.subr.mxu0 %v435
    %1687 = vmatpush1.msra.mxu0 %v434
    %1688 = vmatprep.subr.mxu0 %v439
    %1689 = vmatpush1.msra.mxu0 %v438
    %1690 = vmatprep.subr.mxu0 %v443
    %1691 = vmatpush1.msra.mxu0 %v442
    %1692 = vmatprep.subr.mxu0 0.0
    %1693 = vmatpush1.msra.mxu0 0.0
    %1694 = vmatprep.subr.mxu0 0.0
    %1695 = vmatpush1.msra.mxu0 0.0
    %1696 = vmatprep.subr.mxu0 0.0
    %1697 = vmatpush1.msra.mxu0 0.0
    %1698 = vmatprep.subr.mxu0 0.0
    %1699 = vmatpush1.msra.mxu0 0.0
    %1700 = vmatprep.subr.mxu0 0.0
    %1701 = vmatpush1.msra.mxu0 0.0
    %1702 = vmatprep.subr.mxu0 0.0
    %1703 = vmatpush1.msra.mxu0 0.0
    %1704 = vmatprep.subr.mxu0 0.0
    %1705 = vmatpush1.msra.mxu0 0.0
    %1706 = vmatprep.subr.mxu0 0.0
    %1707 = vmatpush1.msra.mxu0 0.0
    %1708 = vmatprep.subr.mxu0 0.0
    %1709 = vmatpush1.msra.mxu0 0.0
    %1710 = vmatprep.subr.mxu0 0.0
    %1711 = vmatpush1.msra.mxu0 0.0
    %1712 = vmatprep.subr.mxu0 0.0
    %1713 = vmatpush1.msra.mxu0 0.0
    %1714 = vmatprep.subr.mxu0 0.0
    %1715 = vmatpush1.msra.mxu0 0.0
    %1716 = vmatprep.subr.mxu0 0.0
    %1717 = vmatpush1.msra.mxu0 0.0
    %1718 = vmatprep.subr.mxu0 0.0
    %1719 = vmatpush1.msra.mxu0 0.0
    %1720 = vmatprep.subr.mxu0 0.0
    %1721 = vmatpush1.msra.mxu0 0.0
    %1722 = vmatprep.subr.mxu0 0.0
    %1723 = vmatpush1.msra.mxu0 0.0
    %1724 = vmatprep.mubr.f32.mxu0 0.0
    %1725 = vmatmul.mubr.f32.gmra.mrb[0].mxu0 %v1587
    %v1726 = vpop.f32.mrb[0].mxu0
    %v1727 = vadd.f32 0.0, %v1726
    %v1728 = vpop.f32.mrb[0].mxu0
    %v1729 = vadd.f32 0.0, %v1728
    %1730 = vdwg.mxu0
    %v1735 = vrot.slane %v1656, 3
    %v1736 = vrot.slane %v1658, 3
    %v1737 = vrot.slane %v1727, 3
    %v1738 = vrot.slane %v1729, 3
    %v1739 = vrot.slane %v1656, 4
    %v1740 = vrot.slane %v1658, 4
    %v1741 = vrot.slane %v1727, 4
    %v1742 = vrot.slane %v1729, 4
    %v1751 = vadd.f32 %v290, %v1735
    %v1752 = vadd.f32 %v292, %v1736
    %v1753 = vadd.f32 %v367, %v1737
    %v1754 = vadd.f32 %v369, %v1738
    %v1755 = vadd.f32 %v296, %v1739
    %v1756 = vadd.f32 %v298, %v1740
    %v1757 = vadd.f32 %v373, %v1741
    %v1758 = vadd.f32 %v375, %v1742
    %v1759 = vxor.u32 %v1751, 2147483648
    %v1760 = vxor.u32 %v1752, 2147483648
    %v1761 = vxor.u32 %v1755, 2147483648
    %v1762 = vxor.u32 %v1756, 2147483648
    %v1763 = vmul.f32 %v1759, 1.442695
    %v1764 = vpow.pop %v1763
    %v1765 = vmul.f32 %v1760, 1.442695
    %v1766 = vpow.pop %v1765
    %v1767 = vmul.f32 %v1761, 1.442695
    %v1768 = vpow.pop %v1767
    %v1769 = vmul.f32 %v1762, 1.442695
    %v1770 = vpow.pop %v1769
    %v1771 = vadd.f32 %v1764, 1.0
    %v1772 = vadd.f32 %v1766, 1.0
    %v1773 = vadd.f32 %v1768, 1.0
    %v1774 = vadd.f32 %v1770, 1.0
    %v1775 = vrcp.pop %v1771
    %v1776 = vmul.f32 1.0, %v1775
    %v1777 = vrcp.pop %v1772
    %v1778 = vmul.f32 1.0, %v1777
    %v1779 = vrcp.pop %v1773
    %v1780 = vmul.f32 1.0, %v1779
    %v1781 = vrcp.pop %v1774
    %v1782 = vmul.f32 1.0, %v1781
    %v1783 = vtanh.pop %v1753
    %v1784 = vtanh.pop %v1757
    %v1785 = vxor.u32 %v1754, 2147483648
    %v1786 = vxor.u32 %v1758, 2147483648
    %v1787 = vmul.f32 %v1785, 1.442695
    %v1788 = vpow.pop %v1787
    %v1789 = vmul.f32 %v1786, 1.442695
    %v1790 = vpow.pop %v1789
    %v1791 = vadd.f32 %v1788, 1.0
    %v1792 = vadd.f32 %v1790, 1.0
    %v1793 = vrcp.pop %v1791
    %v1794 = vmul.f32 1.0, %v1793
    %v1795 = vrcp.pop %v1792
    %v1796 = vmul.f32 1.0, %v1795
    %v1799 = vrot.slane %v1577, 7
    %v1800 = vrot.slane %v1578, 7
    %v1803 = vmul.f32 %v1778, %v1799
    %v1804 = vmul.f32 %v1782, %v1800
    %v1805 = vmul.f32 %v1776, %v1783
    %v1806 = vmul.f32 %v1780, %v1784
    %v1807 = vadd.f32 %v1803, %v1805
    %v1808 = vadd.f32 %v1804, %v1806
    %v1809 = vtanh.pop %v1807
    %v1810 = vtanh.pop %v1808
    %v1811 = vmul.f32 %v1794, %v1809
    %v1812 = vmul.f32 %v1796, %v1810
    %v1815 = vrot.slane %v1811, 5
    %v1816 = vrot.slane %v1812, 4
    %v1817 = vsel %vm671, %v1816, %v1815
    %1819 = vmatprep.subr.mxu0 %v381
    %1820 = vmatpush1.msra.mxu0 %v380
    %1821 = vmatprep.subr.mxu0 %v385
    %1822 = vmatpush1.msra.mxu0 %v384
    %1823 = vmatprep.subr.mxu0 %v389
    %1824 = vmatpush1.msra.mxu0 %v388
    %1825 = vmatprep.subr.mxu0 %v393
    %1826 = vmatpush1.msra.mxu0 %v392
    %1827 = vmatprep.subr.mxu0 %v397
    %1828 = vmatpush1.msra.mxu0 %v396
    %1829 = vmatprep.subr.mxu0 %v401
    %1830 = vmatpush1.msra.mxu0 %v400
    %1831 = vmatprep.subr.mxu0 %v405
    %1832 = vmatpush1.msra.mxu0 %v404
    %1833 = vmatprep.subr.mxu0 %v409
    %1834 = vmatpush1.msra.mxu0 %v408
    %1835 = vmatprep.subr.mxu0 %v413
    %1836 = vmatpush1.msra.mxu0 %v412
    %1837 = vmatprep.subr.mxu0 %v417
    %1838 = vmatpush1.msra.mxu0 %v416
    %1839 = vmatprep.subr.mxu0 %v421
    %1840 = vmatpush1.msra.mxu0 %v420
    %1841 = vmatprep.subr.mxu0 %v425
    %1842 = vmatpush1.msra.mxu0 %v424
    %1843 = vmatprep.subr.mxu0 %v429
    %1844 = vmatpush1.msra.mxu0 %v428
    %1845 = vmatprep.subr.mxu0 %v433
    %1846 = vmatpush1.msra.mxu0 %v432
    %1847 = vmatprep.subr.mxu0 %v437
    %1848 = vmatpush1.msra.mxu0 %v436
    %1849 = vmatprep.subr.mxu0 %v441
    %1850 = vmatpush1.msra.mxu0 %v440
    %1851 = vmatprep.subr.mxu0 0.0
    %1852 = vmatpush1.msra.mxu0 0.0
    %1853 = vmatprep.subr.mxu0 0.0
    %1854 = vmatpush1.msra.mxu0 0.0
    %1855 = vmatprep.subr.mxu0 0.0
    %1856 = vmatpush1.msra.mxu0 0.0
    %1857 = vmatprep.subr.mxu0 0.0
    %1858 = vmatpush1.msra.mxu0 0.0
    %1859 = vmatprep.subr.mxu0 0.0
    %1860 = vmatpush1.msra.mxu0 0.0
    %1861 = vmatprep.subr.mxu0 0.0
    %1862 = vmatpush1.msra.mxu0 0.0
    %1863 = vmatprep.subr.mxu0 0.0
    %1864 = vmatpush1.msra.mxu0 0.0
    %1865 = vmatprep.subr.mxu0 0.0
    %1866 = vmatpush1.msra.mxu0 0.0
    %1867 = vmatprep.subr.mxu0 0.0
    %1868 = vmatpush1.msra.mxu0 0.0
    %1869 = vmatprep.subr.mxu0 0.0
    %1870 = vmatpush1.msra.mxu0 0.0
    %1871 = vmatprep.subr.mxu0 0.0
    %1872 = vmatpush1.msra.mxu0 0.0
    %1873 = vmatprep.subr.mxu0 0.0
    %1874 = vmatpush1.msra.mxu0 0.0
    %1875 = vmatprep.subr.mxu0 0.0
    %1876 = vmatpush1.msra.mxu0 0.0
    %1877 = vmatprep.subr.mxu0 0.0
    %1878 = vmatpush1.msra.mxu0 0.0
    %1879 = vmatprep.subr.mxu0 0.0
    %1880 = vmatpush1.msra.mxu0 0.0
    %1881 = vmatprep.subr.mxu0 0.0
    %1882 = vmatpush1.msra.mxu0 0.0
    %1883 = vmatprep.mubr.f32.mxu0 0.0
    %1884 = vmatmul.mubr.f32.gmra.mrb[0].mxu0 %v1817
    %v1885 = vpop.f32.mrb[0].mxu0
    %v1886 = vadd.f32 0.0, %v1885
    %v1887 = vpop.f32.mrb[0].mxu0
    %v1888 = vadd.f32 0.0, %v1887
    %1889 = vdwg.mxu0
    %1890 = vmatprep.subr.mxu0 %v383
    %1891 = vmatpush1.msra.mxu0 %v382
    %1892 = vmatprep.subr.mxu0 %v387
    %1893 = vmatpush1.msra.mxu0 %v386
    %1894 = vmatprep.subr.mxu0 %v391
    %1895 = vmatpush1.msra.mxu0 %v390
    %1896 = vmatprep.subr.mxu0 %v395
    %1897 = vmatpush1.msra.mxu0 %v394
    %1898 = vmatprep.subr.mxu0 %v399
    %1899 = vmatpush1.msra.mxu0 %v398
    %1900 = vmatprep.subr.mxu0 %v403
    %1901 = vmatpush1.msra.mxu0 %v402
    %1902 = vmatprep.subr.mxu0 %v407
    %1903 = vmatpush1.msra.mxu0 %v406
    %1904 = vmatprep.subr.mxu0 %v411
    %1905 = vmatpush1.msra.mxu0 %v410
    %1906 = vmatprep.subr.mxu0 %v415
    %1907 = vmatpush1.msra.mxu0 %v414
    %1908 = vmatprep.subr.mxu0 %v419
    %1909 = vmatpush1.msra.mxu0 %v418
    %1910 = vmatprep.subr.mxu0 %v423
    %1911 = vmatpush1.msra.mxu0 %v422
    %1912 = vmatprep.subr.mxu0 %v427
    %1913 = vmatpush1.msra.mxu0 %v426
    %1914 = vmatprep.subr.mxu0 %v431
    %1915 = vmatpush1.msra.mxu0 %v430
    %1916 = vmatprep.subr.mxu0 %v435
    %1917 = vmatpush1.msra.mxu0 %v434
    %1918 = vmatprep.subr.mxu0 %v439
    %1919 = vmatpush1.msra.mxu0 %v438
    %1920 = vmatprep.subr.mxu0 %v443
    %1921 = vmatpush1.msra.mxu0 %v442
    %1922 = vmatprep.subr.mxu0 0.0
    %1923 = vmatpush1.msra.mxu0 0.0
    %1924 = vmatprep.subr.mxu0 0.0
    %1925 = vmatpush1.msra.mxu0 0.0
    %1926 = vmatprep.subr.mxu0 0.0
    %1927 = vmatpush1.msra.mxu0 0.0
    %1928 = vmatprep.subr.mxu0 0.0
    %1929 = vmatpush1.msra.mxu0 0.0
    %1930 = vmatprep.subr.mxu0 0.0
    %1931 = vmatpush1.msra.mxu0 0.0
    %1932 = vmatprep.subr.mxu0 0.0
    %1933 = vmatpush1.msra.mxu0 0.0
    %1934 = vmatprep.subr.mxu0 0.0
    %1935 = vmatpush1.msra.mxu0 0.0
    %1936 = vmatprep.subr.mxu0 0.0
    %1937 = vmatpush1.msra.mxu0 0.0
    %1938 = vmatprep.subr.mxu0 0.0
    %1939 = vmatpush1.msra.mxu0 0.0
    %1940 = vmatprep.subr.mxu0 0.0
    %1941 = vmatpush1.msra.mxu0 0.0
    %1942 = vmatprep.subr.mxu0 0.0
    %1943 = vmatpush1.msra.mxu0 0.0
    %1944 = vmatprep.subr.mxu0 0.0
    %1945 = vmatpush1.msra.mxu0 0.0
    %1946 = vmatprep.subr.mxu0 0.0
    %1947 = vmatpush1.msra.mxu0 0.0
    %1948 = vmatprep.subr.mxu0 0.0
    %1949 = vmatpush1.msra.mxu0 0.0
    %1950 = vmatprep.subr.mxu0 0.0
    %1951 = vmatpush1.msra.mxu0 0.0
    %1952 = vmatprep.subr.mxu0 0.0
    %1953 = vmatpush1.msra.mxu0 0.0
    %1954 = vmatprep.mubr.f32.mxu0 0.0
    %1955 = vmatmul.mubr.f32.gmra.mrb[0].mxu0 %v1817
    %v1956 = vpop.f32.mrb[0].mxu0
    %v1957 = vadd.f32 0.0, %v1956
    %v1958 = vpop.f32.mrb[0].mxu0
    %v1959 = vadd.f32 0.0, %v1958
    %1960 = vdwg.mxu0
    %v1965 = vrot.slane %v1886, 2
    %v1966 = vrot.slane %v1888, 2
    %v1967 = vrot.slane %v1957, 2
    %v1968 = vrot.slane %v1959, 2
    %v1969 = vrot.slane %v1886, 3
    %v1970 = vrot.slane %v1888, 3
    %v1971 = vrot.slane %v1957, 3
    %v1972 = vrot.slane %v1959, 3
    %v1981 = vadd.f32 %v290, %v1965
    %v1982 = vadd.f32 %v292, %v1966
    %v1983 = vadd.f32 %v367, %v1967
    %v1984 = vadd.f32 %v369, %v1968
    %v1985 = vadd.f32 %v296, %v1969
    %v1986 = vadd.f32 %v298, %v1970
    %v1987 = vadd.f32 %v373, %v1971
    %v1988 = vadd.f32 %v375, %v1972
    %v1989 = vxor.u32 %v1981, 2147483648
    %v1990 = vxor.u32 %v1982, 2147483648
    %v1991 = vxor.u32 %v1985, 2147483648
    %v1992 = vxor.u32 %v1986, 2147483648
    %v1993 = vmul.f32 %v1989, 1.442695
    %v1994 = vpow.pop %v1993
    %v1995 = vmul.f32 %v1990, 1.442695
    %v1996 = vpow.pop %v1995
    %v1997 = vmul.f32 %v1991, 1.442695
    %v1998 = vpow.pop %v1997
    %v1999 = vmul.f32 %v1992, 1.442695
    %v2000 = vpow.pop %v1999
    %v2001 = vadd.f32 %v1994, 1.0
    %v2002 = vadd.f32 %v1996, 1.0
    %v2003 = vadd.f32 %v1998, 1.0
    %v2004 = vadd.f32 %v2000, 1.0
    %v2005 = vrcp.pop %v2001
    %v2006 = vmul.f32 1.0, %v2005
    %v2007 = vrcp.pop %v2002
    %v2008 = vmul.f32 1.0, %v2007
    %v2009 = vrcp.pop %v2003
    %v2010 = vmul.f32 1.0, %v2009
    %v2011 = vrcp.pop %v2004
    %v2012 = vmul.f32 1.0, %v2011
    %v2013 = vtanh.pop %v1983
    %v2014 = vtanh.pop %v1987
    %v2015 = vxor.u32 %v1984, 2147483648
    %v2016 = vxor.u32 %v1988, 2147483648
    %v2017 = vmul.f32 %v2015, 1.442695
    %v2018 = vpow.pop %v2017
    %v2019 = vmul.f32 %v2016, 1.442695
    %v2020 = vpow.pop %v2019
    %v2021 = vadd.f32 %v2018, 1.0
    %v2022 = vadd.f32 %v2020, 1.0
    %v2023 = vrcp.pop %v2021
    %v2024 = vmul.f32 1.0, %v2023
    %v2025 = vrcp.pop %v2022
    %v2026 = vmul.f32 1.0, %v2025
    %v2029 = vrot.slane %v1807, 7
    %v2030 = vrot.slane %v1808, 7
    %v2033 = vmul.f32 %v2008, %v2029
    %v2034 = vmul.f32 %v2012, %v2030
    %v2035 = vmul.f32 %v2006, %v2013
    %v2036 = vmul.f32 %v2010, %v2014
    %v2037 = vadd.f32 %v2033, %v2035
    %v2038 = vadd.f32 %v2034, %v2036
    %v2039 = vtanh.pop %v2037
    %v2040 = vtanh.pop %v2038
    %v2041 = vmul.f32 %v2024, %v2039
    %v2042 = vmul.f32 %v2026, %v2040
    %v2045 = vrot.slane %v2041, 6
    %v2046 = vrot.slane %v2042, 5
    %v2047 = vsel %vm671, %v2046, %v2045
    %2049 = vmatprep.subr.mxu0 %v381
    %2050 = vmatpush1.msra.mxu0 %v380
    %2051 = vmatprep.subr.mxu0 %v385
    %2052 = vmatpush1.msra.mxu0 %v384
    %2053 = vmatprep.subr.mxu0 %v389
    %2054 = vmatpush1.msra.mxu0 %v388
    %2055 = vmatprep.subr.mxu0 %v393
    %2056 = vmatpush1.msra.mxu0 %v392
    %2057 = vmatprep.subr.mxu0 %v397
    %2058 = vmatpush1.msra.mxu0 %v396
    %2059 = vmatprep.subr.mxu0 %v401
    %2060 = vmatpush1.msra.mxu0 %v400
    %2061 = vmatprep.subr.mxu0 %v405
    %2062 = vmatpush1.msra.mxu0 %v404
    %2063 = vmatprep.subr.mxu0 %v409
    %2064 = vmatpush1.msra.mxu0 %v408
    %2065 = vmatprep.subr.mxu0 %v413
    %2066 = vmatpush1.msra.mxu0 %v412
    %2067 = vmatprep.subr.mxu0 %v417
    %2068 = vmatpush1.msra.mxu0 %v416
    %2069 = vmatprep.subr.mxu0 %v421
    %2070 = vmatpush1.msra.mxu0 %v420
    %2071 = vmatprep.subr.mxu0 %v425
    %2072 = vmatpush1.msra.mxu0 %v424
    %2073 = vmatprep.subr.mxu0 %v429
    %2074 = vmatpush1.msra.mxu0 %v428
    %2075 = vmatprep.subr.mxu0 %v433
    %2076 = vmatpush1.msra.mxu0 %v432
    %2077 = vmatprep.subr.mxu0 %v437
    %2078 = vmatpush1.msra.mxu0 %v436
    %2079 = vmatprep.subr.mxu0 %v441
    %2080 = vmatpush1.msra.mxu0 %v440
    %2081 = vmatprep.subr.mxu0 0.0
    %2082 = vmatpush1.msra.mxu0 0.0
    %2083 = vmatprep.subr.mxu0 0.0
    %2084 = vmatpush1.msra.mxu0 0.0
    %2085 = vmatprep.subr.mxu0 0.0
    %2086 = vmatpush1.msra.mxu0 0.0
    %2087 = vmatprep.subr.mxu0 0.0
    %2088 = vmatpush1.msra.mxu0 0.0
    %2089 = vmatprep.subr.mxu0 0.0
    %2090 = vmatpush1.msra.mxu0 0.0
    %2091 = vmatprep.subr.mxu0 0.0
    %2092 = vmatpush1.msra.mxu0 0.0
    %2093 = vmatprep.subr.mxu0 0.0
    %2094 = vmatpush1.msra.mxu0 0.0
    %2095 = vmatprep.subr.mxu0 0.0
    %2096 = vmatpush1.msra.mxu0 0.0
    %2097 = vmatprep.subr.mxu0 0.0
    %2098 = vmatpush1.msra.mxu0 0.0
    %2099 = vmatprep.subr.mxu0 0.0
    %2100 = vmatpush1.msra.mxu0 0.0
    %2101 = vmatprep.subr.mxu0 0.0
    %2102 = vmatpush1.msra.mxu0 0.0
    %2103 = vmatprep.subr.mxu0 0.0
    %2104 = vmatpush1.msra.mxu0 0.0
    %2105 = vmatprep.subr.mxu0 0.0
    %2106 = vmatpush1.msra.mxu0 0.0
    %2107 = vmatprep.subr.mxu0 0.0
    %2108 = vmatpush1.msra.mxu0 0.0
    %2109 = vmatprep.subr.mxu0 0.0
    %2110 = vmatpush1.msra.mxu0 0.0
    %2111 = vmatprep.subr.mxu0 0.0
    %2112 = vmatpush1.msra.mxu0 0.0
    %2113 = vmatprep.mubr.f32.mxu0 0.0
    %2114 = vmatmul.mubr.f32.gmra.mrb[0].mxu0 %v2047
    %v2115 = vpop.f32.mrb[0].mxu0
    %v2116 = vadd.f32 0.0, %v2115
    %v2117 = vpop.f32.mrb[0].mxu0
    %v2118 = vadd.f32 0.0, %v2117
    %2119 = vdwg.mxu0
    %2120 = vmatprep.subr.mxu0 %v383
    %2121 = vmatpush1.msra.mxu0 %v382
    %2122 = vmatprep.subr.mxu0 %v387
    %2123 = vmatpush1.msra.mxu0 %v386
    %2124 = vmatprep.subr.mxu0 %v391
    %2125 = vmatpush1.msra.mxu0 %v390
    %2126 = vmatprep.subr.mxu0 %v395
    %2127 = vmatpush1.msra.mxu0 %v394
    %2128 = vmatprep.subr.mxu0 %v399
    %2129 = vmatpush1.msra.mxu0 %v398
    %2130 = vmatprep.subr.mxu0 %v403
    %2131 = vmatpush1.msra.mxu0 %v402
    %2132 = vmatprep.subr.mxu0 %v407
    %2133 = vmatpush1.msra.mxu0 %v406
    %2134 = vmatprep.subr.mxu0 %v411
    %2135 = vmatpush1.msra.mxu0 %v410
    %2136 = vmatprep.subr.mxu0 %v415
    %2137 = vmatpush1.msra.mxu0 %v414
    %2138 = vmatprep.subr.mxu0 %v419
    %2139 = vmatpush1.msra.mxu0 %v418
    %2140 = vmatprep.subr.mxu0 %v423
    %2141 = vmatpush1.msra.mxu0 %v422
    %2142 = vmatprep.subr.mxu0 %v427
    %2143 = vmatpush1.msra.mxu0 %v426
    %2144 = vmatprep.subr.mxu0 %v431
    %2145 = vmatpush1.msra.mxu0 %v430
    %2146 = vmatprep.subr.mxu0 %v435
    %2147 = vmatpush1.msra.mxu0 %v434
    %2148 = vmatprep.subr.mxu0 %v439
    %2149 = vmatpush1.msra.mxu0 %v438
    %2150 = vmatprep.subr.mxu0 %v443
    %2151 = vmatpush1.msra.mxu0 %v442
    %2152 = vmatprep.subr.mxu0 0.0
    %2153 = vmatpush1.msra.mxu0 0.0
    %2154 = vmatprep.subr.mxu0 0.0
    %2155 = vmatpush1.msra.mxu0 0.0
    %2156 = vmatprep.subr.mxu0 0.0
    %2157 = vmatpush1.msra.mxu0 0.0
    %2158 = vmatprep.subr.mxu0 0.0
    %2159 = vmatpush1.msra.mxu0 0.0
    %2160 = vmatprep.subr.mxu0 0.0
    %2161 = vmatpush1.msra.mxu0 0.0
    %2162 = vmatprep.subr.mxu0 0.0
    %2163 = vmatpush1.msra.mxu0 0.0
    %2164 = vmatprep.subr.mxu0 0.0
    %2165 = vmatpush1.msra.mxu0 0.0
    %2166 = vmatprep.subr.mxu0 0.0
    %2167 = vmatpush1.msra.mxu0 0.0
    %2168 = vmatprep.subr.mxu0 0.0
    %2169 = vmatpush1.msra.mxu0 0.0
    %2170 = vmatprep.subr.mxu0 0.0
    %2171 = vmatpush1.msra.mxu0 0.0
    %2172 = vmatprep.subr.mxu0 0.0
    %2173 = vmatpush1.msra.mxu0 0.0
    %2174 = vmatprep.subr.mxu0 0.0
    %2175 = vmatpush1.msra.mxu0 0.0
    %2176 = vmatprep.subr.mxu0 0.0
    %2177 = vmatpush1.msra.mxu0 0.0
    %2178 = vmatprep.subr.mxu0 0.0
    %2179 = vmatpush1.msra.mxu0 0.0
    %2180 = vmatprep.subr.mxu0 0.0
    %2181 = vmatpush1.msra.mxu0 0.0
    %2182 = vmatprep.subr.mxu0 0.0
    %2183 = vmatpush1.msra.mxu0 0.0
    %2184 = vmatprep.mubr.f32.mxu0 0.0
    %2185 = vmatmul.mubr.f32.gmra.mrb[0].mxu0 %v2047
    %v2186 = vpop.f32.mrb[0].mxu0
    %v2187 = vadd.f32 0.0, %v2186
    %v2188 = vpop.f32.mrb[0].mxu0
    %v2189 = vadd.f32 0.0, %v2188
    %2190 = vdwg.mxu0
    %v2195 = vrot.slane %v2116, 1
    %v2196 = vrot.slane %v2118, 1
    %v2197 = vrot.slane %v2187, 1
    %v2198 = vrot.slane %v2189, 1
    %v2199 = vrot.slane %v2116, 2
    %v2200 = vrot.slane %v2118, 2
    %v2201 = vrot.slane %v2187, 2
    %v2202 = vrot.slane %v2189, 2
    %v2211 = vadd.f32 %v290, %v2195
    %v2212 = vadd.f32 %v292, %v2196
    %v2213 = vadd.f32 %v367, %v2197
    %v2214 = vadd.f32 %v369, %v2198
    %v2215 = vadd.f32 %v296, %v2199
    %v2216 = vadd.f32 %v298, %v2200
    %v2217 = vadd.f32 %v373, %v2201
    %v2218 = vadd.f32 %v375, %v2202
    %v2219 = vxor.u32 %v2211, 2147483648
    %v2220 = vxor.u32 %v2212, 2147483648
    %v2221 = vxor.u32 %v2215, 2147483648
    %v2222 = vxor.u32 %v2216, 2147483648
    %v2223 = vmul.f32 %v2219, 1.442695
    %v2224 = vpow.pop %v2223
    %v2225 = vmul.f32 %v2220, 1.442695
    %v2226 = vpow.pop %v2225
    %v2227 = vmul.f32 %v2221, 1.442695
    %v2228 = vpow.pop %v2227
    %v2229 = vmul.f32 %v2222, 1.442695
    %v2230 = vpow.pop %v2229
    %v2231 = vadd.f32 %v2224, 1.0
    %v2232 = vadd.f32 %v2226, 1.0
    %v2233 = vadd.f32 %v2228, 1.0
    %v2234 = vadd.f32 %v2230, 1.0
    %v2235 = vrcp.pop %v2231
    %v2236 = vmul.f32 1.0, %v2235
    %v2237 = vrcp.pop %v2232
    %v2238 = vmul.f32 1.0, %v2237
    %v2239 = vrcp.pop %v2233
    %v2240 = vmul.f32 1.0, %v2239
    %v2241 = vrcp.pop %v2234
    %v2242 = vmul.f32 1.0, %v2241
    %v2243 = vtanh.pop %v2213
    %v2244 = vtanh.pop %v2217
    %v2245 = vxor.u32 %v2214, 2147483648
    %v2246 = vxor.u32 %v2218, 2147483648
    %v2247 = vmul.f32 %v2245, 1.442695
    %v2248 = vpow.pop %v2247
    %v2249 = vmul.f32 %v2246, 1.442695
    %v2250 = vpow.pop %v2249
    %v2251 = vadd.f32 %v2248, 1.0
    %v2252 = vadd.f32 %v2250, 1.0
    %v2253 = vrcp.pop %v2251
    %v2254 = vmul.f32 1.0, %v2253
    %v2255 = vrcp.pop %v2252
    %v2256 = vmul.f32 1.0, %v2255
    %v2259 = vrot.slane %v2037, 7
    %v2260 = vrot.slane %v2038, 7
    %v2263 = vmul.f32 %v2238, %v2259
    %v2264 = vmul.f32 %v2242, %v2260
    %v2265 = vmul.f32 %v2236, %v2243
    %v2266 = vmul.f32 %v2240, %v2244
    %v2267 = vadd.f32 %v2263, %v2265
    %v2268 = vadd.f32 %v2264, %v2266
    %v2269 = vtanh.pop %v2267
    %v2270 = vtanh.pop %v2268
    %v2271 = vmul.f32 %v2254, %v2269
    %v2272 = vmul.f32 %v2256, %v2270
    %vm2273 = vcmask 1040384
    %v2274 = vsel %vm2273, %v666, %v892
    %v2275 = vsel %vm2273, %v667, %v893
    %v2276 = vsel %vm81, %v2274, %v1121
    %v2277 = vsel %vm81, %v2275, %v1122
    %vm2278 = vcmask 1042432
    %v2279 = vsel %vm2278, %v2276, %v1351
    %v2280 = vsel %vm2278, %v2277, %v1352
    %vm2281 = vcmask 1043456
    %v2282 = vsel %vm2281, %v2279, %v1581
    %v2283 = vsel %vm2281, %v2280, %v1582
    %vm2284 = vcmask 1044480
    %v2285 = vsel %vm2284, %v2282, %v1811
    %v2286 = vsel %vm2284, %v2283, %v1812
    %vm2287 = vcmask 1045504
    %v2288 = vsel %vm2287, %v2285, %v2041
    %v2289 = vsel %vm2287, %v2286, %v2042
    %vm2290 = vcmask 1046528
    %v2291 = vsel %vm2290, %v2288, %v2271
    %v2292 = vsel %vm2290, %v2289, %v2272
    %v2293 = vld [vmem:[%s7] sm:$0xff]
    %v2294 = vld [vmem:[%s7 + $0x8] sm:$0xff]
    %v2295 = vld [vmem:[%s7 + $0x10] sm:$0xff]
    %v2296 = vld [vmem:[%s7 + $0x18] sm:$0xff]
    %v2297 = vld [vmem:[%s7 + $0x20] sm:$0xff]
    %v2298 = vld [vmem:[%s7 + $0x28] sm:$0xff]
    %v2299 = vld [vmem:[%s7 + $0x30] sm:$0xff]
    %v2300 = vld [vmem:[%s7 + $0x38] sm:$0xff]
    %v2301 = vld [vmem:[%s7 + $0x40] sm:$0xff]
    %v2302 = vld [vmem:[%s7 + $0x48] sm:$0xff]
    %v2303 = vld [vmem:[%s7 + $0x50] sm:$0xff]
    %v2304 = vld [vmem:[%s7 + $0x58] sm:$0xff]
    %v2305 = vld [vmem:[%s7 + $0x60] sm:$0xff]
    %v2306 = vld [vmem:[%s7 + $0x68] sm:$0xff]
    %v2307 = vld [vmem:[%s7 + $0x70] sm:$0xff]
    %v2308 = vld [vmem:[%s7 + $0x78] sm:$0xff]
    %v2309 = vld [vmem:[%s8] sm:$0x1]
    %v2311 = vlaneseq
    %v2312 = vshrl.u32 %v2311, 7
    %v2313 = vsub.s32 0, %v2312
    %v2314 = vrot.slane %v2309, %v2313
    %2316 = vmatprep.subr.mxu0 0.0
    %2317 = vmatpush1.msra.mxu0 %v2293
    %2318 = vmatprep.subr.mxu0 0.0
    %2319 = vmatpush1.msra.mxu0 %v2294
    %2320 = vmatprep.subr.mxu0 0.0
    %2321 = vmatpush1.msra.mxu0 %v2295
    %2322 = vmatprep.subr.mxu0 0.0
    %2323 = vmatpush1.msra.mxu0 %v2296
    %2324 = vmatprep.subr.mxu0 0.0
    %2325 = vmatpush1.msra.mxu0 %v2297
    %2326 = vmatprep.subr.mxu0 0.0
    %2327 = vmatpush1.msra.mxu0 %v2298
    %2328 = vmatprep.subr.mxu0 0.0
    %2329 = vmatpush1.msra.mxu0 %v2299
    %2330 = vmatprep.subr.mxu0 0.0
    %2331 = vmatpush1.msra.mxu0 %v2300
    %2332 = vmatprep.subr.mxu0 0.0
    %2333 = vmatpush1.msra.mxu0 %v2301
    %2334 = vmatprep.subr.mxu0 0.0
    %2335 = vmatpush1.msra.mxu0 %v2302
    %2336 = vmatprep.subr.mxu0 0.0
    %2337 = vmatpush1.msra.mxu0 %v2303
    %2338 = vmatprep.subr.mxu0 0.0
    %2339 = vmatpush1.msra.mxu0 %v2304
    %2340 = vmatprep.subr.mxu0 0.0
    %2341 = vmatpush1.msra.mxu0 %v2305
    %2342 = vmatprep.subr.mxu0 0.0
    %2343 = vmatpush1.msra.mxu0 %v2306
    %2344 = vmatprep.subr.mxu0 0.0
    %2345 = vmatpush1.msra.mxu0 %v2307
    %2346 = vmatprep.subr.mxu0 0.0
    %2347 = vmatpush1.msra.mxu0 %v2308
    %2348 = vmatprep.subr.mxu0 0.0
    %2349 = vmatpush1.msra.mxu0 0.0
    %2350 = vmatprep.subr.mxu0 0.0
    %2351 = vmatpush1.msra.mxu0 0.0
    %2352 = vmatprep.subr.mxu0 0.0
    %2353 = vmatpush1.msra.mxu0 0.0
    %2354 = vmatprep.subr.mxu0 0.0
    %2355 = vmatpush1.msra.mxu0 0.0
    %2356 = vmatprep.subr.mxu0 0.0
    %2357 = vmatpush1.msra.mxu0 0.0
    %2358 = vmatprep.subr.mxu0 0.0
    %2359 = vmatpush1.msra.mxu0 0.0
    %2360 = vmatprep.subr.mxu0 0.0
    %2361 = vmatpush1.msra.mxu0 0.0
    %2362 = vmatprep.subr.mxu0 0.0
    %2363 = vmatpush1.msra.mxu0 0.0
    %2364 = vmatprep.subr.mxu0 0.0
    %2365 = vmatpush1.msra.mxu0 0.0
    %2366 = vmatprep.subr.mxu0 0.0
    %2367 = vmatpush1.msra.mxu0 0.0
    %2368 = vmatprep.subr.mxu0 0.0
    %2369 = vmatpush1.msra.mxu0 0.0
    %2370 = vmatprep.subr.mxu0 0.0
    %2371 = vmatpush1.msra.mxu0 0.0
    %2372 = vmatprep.subr.mxu0 0.0
    %2373 = vmatpush1.msra.mxu0 0.0
    %2374 = vmatprep.subr.mxu0 0.0
    %2375 = vmatpush1.msra.mxu0 0.0
    %2376 = vmatprep.subr.mxu0 0.0
    %2377 = vmatpush1.msra.mxu0 0.0
    %2378 = vmatprep.subr.mxu0 0.0
    %2379 = vmatpush1.msra.mxu0 0.0
    %2380 = vmatprep.mubr.f32.mxu0 0.0
    %2381 = vmatmul.mubr.f32.gmra.mrb[0].mxu0 %v2291
    %v2382 = vpop.f32.mrb[0].mxu0
    %v2383 = vadd.f32 %v2314, %v2382
    %v2384 = vpop.f32.mrb[0].mxu0
    %2385 = vmatprep.mubr.f32.mxu0 0.0
    %2386 = vmatmul.mubr.f32.gmra.mrb[0].mxu0 %v2292
    %v2387 = vpop.f32.mrb[0].mxu0
    %v2388 = vadd.f32 %v2314, %v2387
    %v2389 = vpop.f32.mrb[0].mxu0
    %2390 = vdwg.mxu0
    %2391 = vst.msk [vmem:[%s9] sm:$0xff] %vm74, %v2383
    %2392 = vst.msk [vmem:[%s9 + $0x8] sm:$0xff] %vm74, %v2388
    %2395 = vrot.lane.b32.xlu0 %v2383, 126
    %v2396 = vpop.permute.xlu0 %2395
    %2397 = vrot.lane.b32.xlu0 %v2388, 126
    %v2398 = vpop.permute.xlu0 %2397
    %vm2401 = vcmask 7168
    %2402 = vst.msk [vmem:[%s10] sm:$0xff] %vm2401, %v2396
    %2403 = vst.msk [vmem:[%s10 + $0x8] sm:$0xff] %vm2401, %v2398
    %v2406 = vrot.slane %v2272, 7
    %v2409 = vrot.slane %v2268, 7
    %v2410 = vcombine.high %v2271, %v2267
    %v2412 = vunpack.c.l.s4 1983009808
    %v2413 = vunpack.c.0.s8 %v2412
    %v2414 = vlaneseq
    %v2415 = vshrl.u32 %v2414, 7
    %v2416 = vsub.s32 %v2413, %v2415
    %v2417 = vrot.slane %v2410, %v2416
    %v2418 = vcombine.high %v2417, %v2417
    %v2419 = vcombine.low %v2406, %v2409
    %v2421 = vunpack.c.l.s4 1983009808
    %v2422 = vunpack.c.0.s8 %v2421
    %v2423 = vlaneseq
    %v2424 = vshrl.u32 %v2423, 7
    %v2425 = vsub.s32 %v2422, %v2424
    %v2426 = vrot.slane %v2419, %v2425
    %vm2427 = vcmask 1042434
    %vm2428 = vmor %vm2273, %vm2427
    %vm2429 = vcmask 1044484
    %vm2430 = vmor %vm2428, %vm2429
    %vm2431 = vcmask 1046534
    %vm2432 = vmor %vm2430, %vm2431
    %v2433 = vrot.slane %v2418, 7
    %v2434 = vrot.slane %v2433, 2
    %v2435 = vrot.slane %v2426, 7
    %v2436 = vsel %vm2432, %v2434, %v2435
    %2438 = vst [vmem:[#allocation7] sm:$0xf] %v2436
    // Predicated region
    $region46: #{tpu_custom_call.1} parent=1 // pred_check
      _
    $region47: #{tpu_custom_call.1} parent=1 // pred_check_branch
      %2440 = sbr.rel (0) target = $region49
    $region48: #{tpu_custom_call.1} parent=1 // pred_region
      _
    $region49: #{tpu_custom_call.1} parent=1 // pred_fallthru
      _
    // Predicated region
    $region50: #{tpu_custom_call.1} parent=1 // pred_check
      _
    $region51: #{tpu_custom_call.1} parent=1 // pred_check_branch
      %2442 = sbr.rel (0) target = $region53
    $region52: #{tpu_custom_call.1} parent=1 // pred_region
      _
    $region53: #{tpu_custom_call.1} parent=1 // pred_fallthru
      _
    // Predicated region
    $region54: #{tpu_custom_call.1} parent=1 // pred_check
      _
    $region55: #{tpu_custom_call.1} parent=1 // pred_check_branch
      %2444 = sbr.rel (0) target = $region57
    $region56: #{tpu_custom_call.1} parent=1 // pred_region
      %s2446 = ssub.s32 64, 64
      %2447 = vsyncadd [#allocation4], %s2446
      %s2449 = sshll.u32 [#allocation7], 4
      %s2450 = int_to_ptr.vmem [resolvable:$true] %s2449
      %2452 = dma.vmem_to_hbm [thread:$0]  %s2450, 64, %s11, [#allocation4]
    $region57: #{tpu_custom_call.1} parent=1 // pred_fallthru
      _
    // Predicated region
    $region58: #{tpu_custom_call.1} parent=1 // pred_check
      _
    $region59: #{tpu_custom_call.1} parent=1 // pred_check_branch
      %2454 = sbr.rel (0) target = $region61
    $region60: #{tpu_custom_call.1} parent=1 // pred_region
      _
    $region61: #{tpu_custom_call.1} parent=1 // pred_fallthru
      _
    // Predicated region
    $region62: #{tpu_custom_call.1} parent=1 // pred_check
      _
    $region63: #{tpu_custom_call.1} parent=1 // pred_check_branch
      %2456 = sbr.rel (0) target = $region65
    $region64: #{tpu_custom_call.1} parent=1 // pred_region
      _
    $region65: #{tpu_custom_call.1} parent=1 // pred_fallthru
      _
    // Predicated region
    $region66: #{tpu_custom_call.1} parent=1 // pred_check
      _
    $region67: #{tpu_custom_call.1} parent=1 // pred_check_branch
      %2458 = sbr.rel (0) target = $region69
    $region68: #{tpu_custom_call.1} parent=1 // pred_region
      %2459 = dma.done [#allocation4], 64
    $region69: #{tpu_custom_call.1} parent=1 // pred_fallthru
      _
    %2460 = vsyncpa [#allocation3], 1
    %2461 = vsyncpa [#allocation6], 1
    %2462 = vsyncpa [#allocation4], 1

</llo_original>
